<compile_context>
chip_gen: v5e
topology: v5e:2x2
jax: 0.10.0
libtpu: 0.0.40
codegen_flags: <defaults>
</compile_context>

<pallas_src>
import math
import numpy as np
import jax
import jax.numpy as jnp
from jax.experimental import pallas as pl
from jax.experimental.pallas import tpu as pltpu

PAD = 2  # covers 3x3 pad=1, 3x3 dilation=2 pad=2, 5x5 pad=2


def _round_up(x, m):
    return (x + m - 1) // m * m


def _vmem_limit_bytes():
    # ~96 MiB on v5e/v6e (128 MiB physical), ~48 MiB on v7x (64 MiB physical).
    try:
        cap = int(pltpu.get_tpu_info().vmem_capacity_bytes)
    except Exception:
        cap = 64 * 1024 * 1024
    return max(32 * 1024 * 1024, cap * 3 // 4)


def _geometry(C, H, W, vmem_limit):
    """Wide-row / row-tile geometry.

    Wp      : row stride in lanes (>= W + 4 junk columns acting as horizontal 0-pad)
    TH      : tile height in rows, chosen so TH*Wp % 128 == 0 and the per-step
              live set fits the VMEM budget
    Ltile   : TH*Wp interior lanes per tile (128-aligned)
    Lslab   : haloed slab length = (TH + 4)*Wp + 4 (2 halo rows + 2 lanes each side)
    base    : slab lane of interior lane 0
    """
    Wp = _round_up(W + 2 * PAD, 4)
    m = 128 // math.gcd(Wp, 128)                 # TH multiple -> TH*Wp % 128 == 0
    # ~14 live (C, tile) f32 tensors per kernel-2 step (accs, sx, hx, out, dbl-buffered IO)
    rows_budget = max(m, (vmem_limit // 2) // (14 * 4 * C * Wp))
    TH = min(_round_up(H, m), max(m, rows_budget // m * m))
    NT = -(-H // TH)
    Hrows = NT * TH
    Ltile = TH * Wp
    Lslab = (TH + 2 * PAD) * Wp + 2 * PAD
    Lslab_p = _round_up(Lslab, 128)
    Lglob = (Hrows + 2 * PAD) * Wp + 2 * PAD
    base = PAD * Wp + PAD
    return dict(Wp=Wp, TH=TH, NT=NT, Hrows=Hrows, Ltile=Ltile,
                Lslab=Lslab, Lslab_p=Lslab_p, Lglob=Lglob, base=base)


# ---------------------------------------------------------------------------
# In-kernel math helpers
# ---------------------------------------------------------------------------
def _gelu(v):
    # tanh-GELU (single EUP tanh); |err| vs exact erf GELU < 1e-3, within tolerance.
    return 0.5 * v * (1.0 + jnp.tanh(0.7978845608028654 * (v + 0.044715 * v * v * v)))


def _ln_c(v, g, b, eps=1e-6):
    # channels_first LayerNorm: statistics over the channel (sublane) axis.
    u = jnp.mean(v, axis=0, keepdims=True)
    d = v - u
    s = jnp.mean(d * d, axis=0, keepdims=True)
    return g * (d * jax.lax.rsqrt(s + eps)) + b


# ---------------------------------------------------------------------------
# Pass 1: proj_1 -> GELU -> LN, depthwise 5x5 (h_ctx), per-tile spatial sums
# ---------------------------------------------------------------------------
def _make_kernel1(C, geo):
    Wp, Ltile, Lslab_p, BASE = geo['Wp'], geo['Ltile'], geo['Lslab_p'], geo['base']

    def kernel(x_ref, mask_ref, w1_ref, wdw_ref, vecs_ref,
               xn_ref, hx_ref, psum_ref, xnf):
        f32 = jnp.float32
        x = x_ref[0, 0]                       # (C, Lslab_p) bf16 (haloed slab)
        mask = mask_ref[0]                    # (1, Lslab_p) f32, 1 on real pixels

        def col(i):
            return vecs_ref[:, i:i + 1]

        # proj_1 (1x1 conv, bf16 MXU, f32 acc) -> GELU -> channels_first LN,
        # masked to zero on junk columns / padding rows so the conv taps see 0-pad.
        xn = _ln_c(_gelu(jnp.dot(w1_ref[...], x, preferred_element_type=f32)
                         + col(0)), col(1), col(2)) * mask
        xnf[...] = xn                                     # f32 copy for the taps
        xn_ref[0, 0] = xn.astype(jnp.bfloat16)            # haloed slab for pass 2

        # depthwise 5x5 on the tile interior; one f32 accumulator.
        hacc = jnp.zeros((C, Ltile), f32)
        for dy in range(-2, 3):
            for dx in range(-2, 3):
                off = BASE + dy * Wp + dx
                t5 = (dy + 2) * 5 + (dx + 2)
                hacc = hacc + xnf[:, off:off + Ltile] * wdw_ref[:, t5:t5 + 1]
        hx = _gelu(hacc)
        hx_ref[0] = hx

        # per-tile, per-channel spatial partial sum over REAL pixels only.
        m_int = mask[:, BASE:BASE + Ltile]
        s = jnp.sum(hx * m_int, axis=1, keepdims=True)    # (C, 1)
        psum_ref[0, 0] = s + jnp.zeros((C, 128), f32)

    return kernel


# ---------------------------------------------------------------------------
# Pass 2: grouped 3x3 + dilated 3x3, norms, softmax-gated h branch, proj_2
# ---------------------------------------------------------------------------
def _make_kernel2(C, G, geo):
    Wp, Ltile, Lslab_p, BASE = geo['Wp'], geo['Ltile'], geo['Lslab_p'], geo['base']

    def mm(w_ref, v):                         # single-pass bf16 MXU matmul, f32 acc
        return jnp.dot(w_ref[...], v.astype(jnp.bfloat16),
                       preferred_element_type=jnp.float32)

    def kernel(xn_ref, hx_ref, soft_ref, w2a_ref, w2b_ref,
               wg1_ref, wg2_ref, vecs_ref, out_ref, xnf, s_scr):
        f32 = jnp.float32

        def col(i):
            return vecs_ref[:, i:i + 1]

        # one bf16 -> f32 upconvert pass; all tap loads below are plain f32 fmas.
        xnf[...] = xn_ref[0, 0].astype(f32)

        taps1 = [(dy, dx) for dy in (-1, 0, 1) for dx in (-1, 0, 1)]
        taps2 = [(dy, dx) for dy in (-2, 0, 2) for dx in (-2, 0, 2)]

        # grouped 3x3 / dilated 3x3 on the VPU, one within-group output block o at
        # a time so only a single (G, Ltile) accumulator is live (no spill storm).
        # TODO(synk): pad C to a multiple of 32 so these G-row slices are vreg-aligned.
        for o in range(4):
            def conv(taps, wg_ref, dil):
                acc = jnp.zeros((G, Ltile), f32)
                for (dy, dx) in taps:
                    t = (dy // dil + 1) * 3 + (dx // dil + 1)
                    off = BASE + dy * Wp + dx
                    for j in range(4):
                        k = (t * 4 + o) * 4 + j
                        acc = acc + wg_ref[:, k:k + 1] * xnf[j * G:(j + 1) * G,
                                                             off:off + Ltile]
                return acc

            lo, hi = o * G, (o + 1) * G
            s1 = conv(taps1, wg1_ref, 1) + vecs_ref[lo:hi, 3:4]
            s2 = conv(taps2, wg2_ref, 2) + vecs_ref[lo:hi, 4:5]
            s_scr[lo:hi, :] = _gelu(s1) + _gelu(s2)       # merged s_ctx scratch

        sx = _ln_c(s_scr[...], col(5), col(6))

        hx = hx_ref[0]                                    # (C, Ltile) f32
        hx_t = xnf[:, BASE:BASE + Ltile] - jnp.mean(hx, axis=0, keepdims=True)
        hx2 = _ln_c(hx + soft_ref[0] * hx_t, col(7), col(8))

        # proj_2 on [sx ; hx2] without a lane concat: two matmuls summed.
        out_ref[0] = _gelu(mm(w2a_ref, sx) + mm(w2b_ref, hx2) + col(9))

    return kernel


# ---------------------------------------------------------------------------
# Parameter preparation (host-side glue)
# ---------------------------------------------------------------------------
def _pack_grouped(w, G):
    """(C, 4, 3, 3) grouped conv weight -> (G, 144) columns indexed by
    (tap, out-within-group o, in-within-group j); groups live on sublanes."""
    w = np.asarray(w, np.float32)
    out = np.zeros((G, 9 * 4 * 4), np.float32)
    for ky in range(3):
        for kx in range(3):
            t = ky * 3 + kx
            for o in range(4):
                for j in range(4):
                    out[:, (t * 4 + o) * 4 + j] = w[np.arange(G) * 4 + o, j, ky, kx]
    return jnp.asarray(out)


def init_params(key, C):
    ks = jax.random.split(key, 9)
    r = lambda k, shape: 0.1 * jax.random.normal(k, shape, jnp.float32)
    ones = jnp.ones((C,), jnp.float32)
    zeros = jnp.zeros((C,), jnp.float32)
    return dict(
        w_proj1=r(ks[0], (C, C, 1, 1)),     b_proj1=r(ks[1], (C,)),
        w_proj2=r(ks[2], (C, 2 * C, 1, 1)), b_proj2=r(ks[3], (C,)),
        w_s1=r(ks[4], (C, 4, 3, 3)),        b_s1=r(ks[5], (C,)),
        w_s2=r(ks[6], (C, 4, 3, 3)),        b_s2=r(ks[7], (C,)),
        w_h=r(ks[8], (C, 1, 5, 5)),
        g_p=ones, bt_p=zeros, g_s=ones, bt_s=zeros, g_h=ones, bt_h=zeros,
    )


# ---------------------------------------------------------------------------
# Wrapper around the two pallas_calls
# ---------------------------------------------------------------------------
def mcfs_forward(x_nchw, p):
    B, C, H, W = x_nchw.shape
    assert C % 4 == 0, "MCFS requires dim % 4 == 0"
    G = C // 4

    vmem_limit = _vmem_limit_bytes()
    geo = _geometry(C, H, W, vmem_limit)
    Wp, TH, NT, Hrows = geo['Wp'], geo['TH'], geo['NT'], geo['Hrows']
    Ltile, Lslab, Lslab_p, Lglob = geo['Ltile'], geo['Lslab'], geo['Lslab_p'], geo['Lglob']

    # channel permutation: original c = g*4 + o  ->  permuted q = o*G + g, so every
    # within-group index owns a contiguous block of G sublanes (VPU grouped conv).
    perm = np.array([(q % G) * 4 + q // G for q in range(C)], np.int32)

    # ---- padded "wide" global layout (bf16): junk columns per row (horizontal
    # zero pad), PAD zero rows top/bottom, PAD extra lanes at both ends so every
    # haloed tile slab read is in-bounds and pre-zero-padded.
    x_pad = jnp.pad(x_nchw.astype(jnp.bfloat16),
                    ((0, 0), (0, 0), (PAD, Hrows - H + PAD), (0, Wp - W)))
    x_glob = jnp.pad(x_pad.reshape(B, C, (Hrows + 2 * PAD) * Wp),
                     ((0, 0), (0, 0), (PAD, PAD)))            # (B, C, Lglob)

    # per-tile haloed slabs (overlapping windows gathered host-side, bf16).
    idx = (np.arange(NT)[:, None] * TH * Wp
           + np.arange(Lslab_p)[None, :]).astype(np.int64)
    idx = np.minimum(idx, Lglob - 1).astype(np.int32)
    x_slabs = jnp.swapaxes(x_glob[:, :, jnp.asarray(idx)], 1, 2)  # (B, NT, C, Lslab_p)

    # real-pixel mask in slab coordinates (junk cols, padding rows, slab tail = 0).
    g = np.arange(Lglob) - PAD
    row, colm = g // Wp, g % Wp
    valid = ((g >= 0) & (row >= PAD) & (row < PAD + H) & (colm < W)).astype(np.float32)
    mask_np = valid[idx]
    mask_np[:, Lslab:] = 0.0
    mask_slab = jnp.asarray(mask_np.reshape(NT, 1, Lslab_p))

    # ---- weights ----
    w1 = jnp.asarray(np.asarray(p['w_proj1'])[:, :, 0, 0][perm, :], jnp.bfloat16)
    w2 = np.asarray(p['w_proj2'])[:, :, 0, 0]
    w2a = jnp.asarray(w2[:, :C][:, perm], jnp.bfloat16)       # acts on sx
    w2b = jnp.asarray(w2[:, C:][:, perm], jnp.bfloat16)       # acts on hx
    wg1 = _pack_grouped(p['w_s1'], G)                         # (G, 144)
    wg2 = _pack_grouped(p['w_s2'], G)                         # (G, 144)
    wdw = jnp.asarray(np.asarray(p['w_h'], np.float32)[perm, 0, :, :].reshape(C, 25))
    vperm = lambda v: np.asarray(v, np.float32)[perm]
    vecs = jnp.asarray(np.stack([
        vperm(p['b_proj1']), vperm(p['g_p']), vperm(p['bt_p']),
        vperm(p['b_s1']), vperm(p['b_s2']), vperm(p['g_s']), vperm(p['bt_s']),
        vperm(p['g_h']), vperm(p['bt_h']),
        np.asarray(p['b_proj2'], np.float32),                 # proj_2 bias: original order
    ], axis=1))                                               # (C, 10)

    cparams = pltpu.CompilerParams(
        dimension_semantics=("parallel", "parallel"),
        vmem_limit_bytes=vmem_limit)

    # ---- pass 1 ----
    xn_slabs, hx, psums = pl.pallas_call(
        _make_kernel1(C, geo),
        out_shape=(jax.ShapeDtypeStruct((B, NT, C, Lslab_p), jnp.bfloat16),
                   jax.ShapeDtypeStruct((B, C, NT * Ltile), jnp.float32),
                   jax.ShapeDtypeStruct((B, NT, C, 128), jnp.float32)),
        grid_spec=pltpu.PrefetchScalarGridSpec(
            num_scalar_prefetch=0,
            grid=(B, NT),
            in_specs=[
                pl.BlockSpec((1, 1, C, Lslab_p), lambda b, t: (b, t, 0, 0)),  # x slab
                pl.BlockSpec((1, 1, Lslab_p), lambda b, t: (t, 0, 0)),        # mask
                pl.BlockSpec((C, C), lambda b, t: (0, 0)),                    # proj_1 w
                pl.BlockSpec((C, 25), lambda b, t: (0, 0)),                   # h_ctx w
                pl.BlockSpec((C, 10), lambda b, t: (0, 0)),                   # vectors
            ],
            out_specs=[
                pl.BlockSpec((1, 1, C, Lslab_p), lambda b, t: (b, t, 0, 0)),  # xn slab
                pl.BlockSpec((1, C, Ltile), lambda b, t: (b, 0, t)),          # hx
                pl.BlockSpec((1, 1, C, 128), lambda b, t: (b, t, 0, 0)),      # partial sums
            ],
            scratch_shapes=[pltpu.VMEM((C, Lslab_p), jnp.float32)]),
        compiler_params=cparams,
    )(x_slabs, mask_slab, w1, wdw, vecs)

    # global spatial softmax over channels (tiny, plain JAX between the passes).
    hm = jnp.sum(psums[:, :, :, 0], axis=1) / float(H * W)        # (B, C)
    soft = jax.nn.softmax(hm, axis=1)[:, :, None]                 # (B, C, 1)

    # ---- pass 2 ----
    out_wide = pl.pallas_call(
        _make_kernel2(C, G, geo),
        out_shape=jax.ShapeDtypeStruct((B, C, NT * Ltile), jnp.float32),
        grid_spec=pltpu.PrefetchScalarGridSpec(
            num_scalar_prefetch=0,
            grid=(B, NT),
            in_specs=[
                pl.BlockSpec((1, 1, C, Lslab_p), lambda b, t: (b, t, 0, 0)),  # xn slab
                pl.BlockSpec((1, C, Ltile), lambda b, t: (b, 0, t)),          # hx
                pl.BlockSpec((1, C, 1), lambda b, t: (b, 0, 0)),              # softmax gate
                pl.BlockSpec((C, C), lambda b, t: (0, 0)),                    # proj_2 w (sx)
                pl.BlockSpec((C, C), lambda b, t: (0, 0)),                    # proj_2 w (hx)
                pl.BlockSpec((G, 144), lambda b, t: (0, 0)),                  # s_ctx_1 w
                pl.BlockSpec((G, 144), lambda b, t: (0, 0)),                  # s_ctx_2 w
                pl.BlockSpec((C, 10), lambda b, t: (0, 0)),                   # vectors
            ],
            out_specs=pl.BlockSpec((1, C, Ltile), lambda b, t: (b, 0, t)),
            scratch_shapes=[pltpu.VMEM((C, Lslab_p), jnp.float32),            # xn f32
                            pltpu.VMEM((C, Ltile), jnp.float32)]),            # merged s_ctx
        compiler_params=cparams,
    )(xn_slabs, hx, soft, w2a, w2b, wg1, wg2, vecs)

    # drop junk columns / junk rows; output is NCHW like the torch module.
    return out_wide.reshape(B, C, Hrows, Wp)[:, :, :H, :W]


# ---------------------------------------------------------------------------
# Pure-JAX reference (mirrors the PyTorch module exactly: erf GELU, f32 convs)
# ---------------------------------------------------------------------------
def _gelu_exact(x):
    return 0.5 * x * (1.0 + jax.lax.erf(x * 0.7071067811865476))


def ref_forward(x, p):
    C = x.shape[1]
    groups = C // 4
    HIGH = jax.lax.Precision.HIGHEST

    def conv(x, w, b=None, padding=0, dilation=1, fgc=1):
        dn = jax.lax.conv_dimension_numbers(x.shape, w.shape, ('NCHW', 'OIHW', 'NCHW'))
        y = jax.lax.conv_general_dilated(
            x, w, window_strides=(1, 1),
            padding=[(padding, padding), (padding, padding)],
            rhs_dilation=(dilation, dilation),
            dimension_numbers=dn, feature_group_count=fgc, precision=HIGH)
        if b is not None:
            y = y + b[None, :, None, None]
        return y

    def ln_cf(x, g, b, eps=1e-6):
        u = jnp.mean(x, axis=1, keepdims=True)
        s = jnp.mean((x - u) ** 2, axis=1, keepdims=True)
        return g[None, :, None, None] * ((x - u) / jnp.sqrt(s + eps)) \
            + b[None, :, None, None]

    act = _gelu_exact
    x = ln_cf(act(conv(x, p['w_proj1'], p['b_proj1'])), p['g_p'], p['bt_p'])
    sx1 = act(conv(x, p['w_s1'], p['b_s1'], padding=1, fgc=groups))
    sx2 = act(conv(x, p['w_s2'], p['b_s2'], padding=2, dilation=2, fgc=groups))
    sx = ln_cf(sx1 + sx2, p['g_s'], p['bt_s'])
    hx = act(conv(x, p['w_h'], None, padding=2, fgc=C))
    hx_t = x - jnp.mean(hx, axis=1, keepdims=True)
    soft = jax.nn.softmax(jnp.mean(hx, axis=(2, 3)), axis=1)[:, :, None, None]
    hx_t = soft * hx_t
    hx = ln_cf(hx + hx_t, p['g_h'], p['bt_h'])
    return act(conv(jnp.concatenate([sx, hx], axis=1), p['w_proj2'], p['b_proj2']))


if __name__ == "__main__":
    B, C, H, W = 2, 8, 16, 16      # dim=8 (divisible by 4, 2 groups), spatial 16x16
    key = jax.random.PRNGKey(0)
    kp, kx = jax.random.split(key)
    params = init_params(kp, C)
    x = jax.random.normal(kx, (B, C, H, W), jnp.float32)

    out = jax.block_until_ready(mcfs_forward(x, params))
    ref = jax.block_until_ready(ref_forward(x, params))
    err = float(jnp.max(jnp.abs(out - ref)))
    assert out.shape == (B, C, H, W) and err < 5e-2, f"max abs err {err}"
    print("KERNEL_OK")
</pallas_src>

<mosaic_0001>
module attributes {stable_mosaic.version = 11 : i64} {
  func.func @kernel(%arg0: i32, %arg1: i32, %arg2: memref<1x1x8x768xbf16, #tpu.memory_space<vmem>>, %arg3: memref<1x1x768xf32, #tpu.memory_space<vmem>>, %arg4: memref<8x8xbf16, #tpu.memory_space<vmem>>, %arg5: memref<8x25xf32, #tpu.memory_space<vmem>>, %arg6: memref<8x10xf32, #tpu.memory_space<vmem>>, %arg7: memref<1x1x8x768xbf16, #tpu.memory_space<vmem>>, %arg8: memref<1x8x640xf32, #tpu.memory_space<vmem>>, %arg9: memref<1x1x8x128xf32, #tpu.memory_space<vmem>>, %arg10: memref<8x768xf32, #tpu.memory_space<vmem>>) attributes {dimension_semantics = [#tpu.dimension_semantics<parallel>, #tpu.dimension_semantics<parallel>], iteration_bounds = array<i64: 2, 1>, scalar_prefetch = 0 : i64, scratch_operands = 1 : i64, tpu.core_type = #tpu.core_type<tc>, window_params = [{transform_indices = @transform_0, window_bounds = array<i64: 1, 1, 8, 768>}, {transform_indices = @transform_1, window_bounds = array<i64: 1, 1, 768>}, {pipeline_mode = #tpu.pipeline_mode<synchronous>, transform_indices = @transform_2, window_bounds = array<i64: 8, 8>}, {pipeline_mode = #tpu.pipeline_mode<synchronous>, transform_indices = @transform_3, window_bounds = array<i64: 8, 25>}, {pipeline_mode = #tpu.pipeline_mode<synchronous>, transform_indices = @transform_4, window_bounds = array<i64: 8, 10>}, {transform_indices = @transform_5, window_bounds = array<i64: 1, 1, 8, 768>}, {transform_indices = @transform_6, window_bounds = array<i64: 1, 8, 640>}, {transform_indices = @transform_7, window_bounds = array<i64: 1, 1, 8, 128>}]} {
    %c0 = arith.constant 0 : index
    %c0_0 = arith.constant 0 : index
    %c0_1 = arith.constant 0 : index
    %c0_2 = arith.constant 0 : index
    %0 = vector.load %arg2[%c0, %c0_0, %c0_1, %c0_2] : memref<1x1x8x768xbf16, #tpu.memory_space<vmem>>, vector<1x1x8x768xbf16>
    %1 = vector.shape_cast %0 : vector<1x1x8x768xbf16> to vector<8x768xbf16>
    %c0_3 = arith.constant 0 : index
    %c0_4 = arith.constant 0 : index
    %c0_5 = arith.constant 0 : index
    %2 = vector.load %arg3[%c0_3, %c0_4, %c0_5] : memref<1x1x768xf32, #tpu.memory_space<vmem>>, vector<1x1x768xf32>
    %3 = vector.shape_cast %2 : vector<1x1x768xf32> to vector<1x768xf32>
    %c0_6 = arith.constant 0 : index
    %c0_7 = arith.constant 0 : index
    %4 = vector.load %arg4[%c0_6, %c0_7] : memref<8x8xbf16, #tpu.memory_space<vmem>>, vector<8x8xbf16>
    %cst = arith.constant dense<0.000000e+00> : vector<8x768xf32>
    %5 = tpu.matmul %4, %1, %cst {dimension_numbers = #tpu.dot_dimension_numbers<[1], [0], [0], [1], [0, 0, 1, 1], [], []>} : vector<8x8xbf16>, vector<8x768xbf16>, vector<8x768xf32> -> vector<8x768xf32>
    %c0_8 = arith.constant 0 : index
    %c0_9 = arith.constant 0 : index
    %6 = vector.load %arg6[%c0_8, %c0_9] : memref<8x10xf32, #tpu.memory_space<vmem>>, vector<8x1xf32>
    %7 = vector.broadcast %6 : vector<8x1xf32> to vector<8x768xf32>
    %8 = arith.addf %5, %7 : vector<8x768xf32>
    %cst_10 = arith.constant 5.000000e-01 : f32
    %9 = vector.broadcast %cst_10 : f32 to vector<8x768xf32>
    %10 = arith.mulf %9, %8 : vector<8x768xf32>
    %cst_11 = arith.constant 4.471500e-02 : f32
    %11 = vector.broadcast %cst_11 : f32 to vector<8x768xf32>
    %12 = arith.mulf %11, %8 : vector<8x768xf32>
    %13 = arith.mulf %12, %8 : vector<8x768xf32>
    %14 = arith.mulf %13, %8 : vector<8x768xf32>
    %15 = arith.addf %8, %14 : vector<8x768xf32>
    %cst_12 = arith.constant 0.797884583 : f32
    %16 = vector.broadcast %cst_12 : f32 to vector<8x768xf32>
    %17 = arith.mulf %16, %15 : vector<8x768xf32>
    %18 = math.tanh %17 : vector<8x768xf32>
    %cst_13 = arith.constant 1.000000e+00 : f32
    %19 = vector.broadcast %cst_13 : f32 to vector<8x768xf32>
    %20 = arith.addf %19, %18 : vector<8x768xf32>
    %21 = arith.mulf %10, %20 : vector<8x768xf32>
    %c0_14 = arith.constant 0 : index
    %c1 = arith.constant 1 : index
    %22 = vector.load %arg6[%c0_14, %c1] : memref<8x10xf32, #tpu.memory_space<vmem>>, vector<8x1xf32>
    %c0_15 = arith.constant 0 : index
    %c2 = arith.constant 2 : index
    %23 = vector.load %arg6[%c0_15, %c2] : memref<8x10xf32, #tpu.memory_space<vmem>>, vector<8x1xf32>
    %cst_16 = arith.constant dense<0.000000e+00> : vector<768xf32>
    %24 = vector.multi_reduction <add>, %21, %cst_16 [0] : vector<8x768xf32> to vector<768xf32>
    %25 = vector.shape_cast %24 : vector<768xf32> to vector<1x768xf32>
    %cst_17 = arith.constant 8.000000e+00 : f32
    %26 = vector.broadcast %cst_17 : f32 to vector<1x768xf32>
    %27 = arith.divf %25, %26 : vector<1x768xf32>
    %28 = vector.broadcast %27 : vector<1x768xf32> to vector<8x768xf32>
    %29 = arith.subf %21, %28 : vector<8x768xf32>
    %30 = arith.mulf %29, %29 : vector<8x768xf32>
    %cst_18 = arith.constant dense<0.000000e+00> : vector<768xf32>
    %31 = vector.multi_reduction <add>, %30, %cst_18 [0] : vector<8x768xf32> to vector<768xf32>
    %32 = vector.shape_cast %31 : vector<768xf32> to vector<1x768xf32>
    %cst_19 = arith.constant 8.000000e+00 : f32
    %33 = vector.broadcast %cst_19 : f32 to vector<1x768xf32>
    %34 = arith.divf %32, %33 : vector<1x768xf32>
    %cst_20 = arith.constant 9.99999997E-7 : f32
    %35 = vector.broadcast %cst_20 : f32 to vector<1x768xf32>
    %36 = arith.addf %34, %35 : vector<1x768xf32>
    %37 = math.rsqrt %36 : vector<1x768xf32>
    %38 = vector.broadcast %37 : vector<1x768xf32> to vector<8x768xf32>
    %39 = arith.mulf %29, %38 : vector<8x768xf32>
    %40 = vector.broadcast %22 : vector<8x1xf32> to vector<8x768xf32>
    %41 = arith.mulf %40, %39 : vector<8x768xf32>
    %42 = vector.broadcast %23 : vector<8x1xf32> to vector<8x768xf32>
    %43 = arith.addf %41, %42 : vector<8x768xf32>
    %44 = vector.broadcast %3 : vector<1x768xf32> to vector<8x768xf32>
    %45 = arith.mulf %43, %44 : vector<8x768xf32>
    %c0_21 = arith.constant 0 : index
    %c0_22 = arith.constant 0 : index
    %46 = vector.load %arg10[%c0_21, %c0_22] : memref<8x768xf32, #tpu.memory_space<vmem>>, vector<8x768xf32>
    tpu.vector_store %arg10[%c0_21, %c0_22], %45 {strides = array<i32>} : memref<8x768xf32, #tpu.memory_space<vmem>>, vector<8x768xf32>,
    %47 = arith.truncf %45 : vector<8x768xf32> to vector<8x768xbf16>
    %c0_23 = arith.constant 0 : index
    %c0_24 = arith.constant 0 : index
    %c0_25 = arith.constant 0 : index
    %c0_26 = arith.constant 0 : index
    %48 = vector.load %arg7[%c0_23, %c0_24, %c0_25, %c0_26] : memref<1x1x8x768xbf16, #tpu.memory_space<vmem>>, vector<1x1x8x768xbf16>
    %49 = vector.shape_cast %48 : vector<1x1x8x768xbf16> to vector<8x768xbf16>
    %50 = vector.shape_cast %47 : vector<8x768xbf16> to vector<1x1x8x768xbf16>
    tpu.vector_store %arg7[%c0_23, %c0_24, %c0_25, %c0_26], %50 {strides = array<i32>} : memref<1x1x8x768xbf16, #tpu.memory_space<vmem>>, vector<1x1x8x768xbf16>,
    %cst_27 = arith.constant 0.000000e+00 : f32
    %51 = vector.broadcast %cst_27 : f32 to vector<8x640xf32>
    %c0_28 = arith.constant 0 : index
    %c0_29 = arith.constant 0 : index
    %52 = vector.load %arg10[%c0_28, %c0_29] : memref<8x768xf32, #tpu.memory_space<vmem>>, vector<8x640xf32>
    %c0_30 = arith.constant 0 : index
    %c0_31 = arith.constant 0 : index
    %53 = vector.load %arg5[%c0_30, %c0_31] : memref<8x25xf32, #tpu.memory_space<vmem>>, vector<8x1xf32>
    %54 = vector.broadcast %53 : vector<8x1xf32> to vector<8x640xf32>
    %55 = arith.mulf %52, %54 : vector<8x640xf32>
    %56 = arith.addf %51, %55 : vector<8x640xf32>
    %c0_32 = arith.constant 0 : index
    %c1_33 = arith.constant 1 : index
    %57 = vector.load %arg10[%c0_32, %c1_33] : memref<8x768xf32, #tpu.memory_space<vmem>>, vector<8x640xf32>
    %c0_34 = arith.constant 0 : index
    %c1_35 = arith.constant 1 : index
    %58 = vector.load %arg5[%c0_34, %c1_35] : memref<8x25xf32, #tpu.memory_space<vmem>>, vector<8x1xf32>
    %59 = vector.broadcast %58 : vector<8x1xf32> to vector<8x640xf32>
    %60 = arith.mulf %57, %59 : vector<8x640xf32>
    %61 = arith.addf %56, %60 : vector<8x640xf32>
    %c0_36 = arith.constant 0 : index
    %c2_37 = arith.constant 2 : index
    %62 = vector.load %arg10[%c0_36, %c2_37] : memref<8x768xf32, #tpu.memory_space<vmem>>, vector<8x640xf32>
    %c0_38 = arith.constant 0 : index
    %c2_39 = arith.constant 2 : index
    %63 = vector.load %arg5[%c0_38, %c2_39] : memref<8x25xf32, #tpu.memory_space<vmem>>, vector<8x1xf32>
    %64 = vector.broadcast %63 : vector<8x1xf32> to vector<8x640xf32>
    %65 = arith.mulf %62, %64 : vector<8x640xf32>
    %66 = arith.addf %61, %65 : vector<8x640xf32>
    %c0_40 = arith.constant 0 : index
    %c3 = arith.constant 3 : index
    %67 = vector.load %arg10[%c0_40, %c3] : memref<8x768xf32, #tpu.memory_space<vmem>>, vector<8x640xf32>
    %c0_41 = arith.constant 0 : index
    %c3_42 = arith.constant 3 : index
    %68 = vector.load %arg5[%c0_41, %c3_42] : memref<8x25xf32, #tpu.memory_space<vmem>>, vector<8x1xf32>
    %69 = vector.broadcast %68 : vector<8x1xf32> to vector<8x640xf32>
    %70 = arith.mulf %67, %69 : vector<8x640xf32>
    %71 = arith.addf %66, %70 : vector<8x640xf32>
    %c0_43 = arith.constant 0 : index
    %c4 = arith.constant 4 : index
    %72 = vector.load %arg10[%c0_43, %c4] : memref<8x768xf32, #tpu.memory_space<vmem>>, vector<8x640xf32>
    %c0_44 = arith.constant 0 : index
    %c4_45 = arith.constant 4 : index
    %73 = vector.load %arg5[%c0_44, %c4_45] : memref<8x25xf32, #tpu.memory_space<vmem>>, vector<8x1xf32>
    %74 = vector.broadcast %73 : vector<8x1xf32> to vector<8x640xf32>
    %75 = arith.mulf %72, %74 : vector<8x640xf32>
    %76 = arith.addf %71, %75 : vector<8x640xf32>
    %c0_46 = arith.constant 0 : index
    %c20 = arith.constant 20 : index
    %77 = vector.load %arg10[%c0_46, %c20] : memref<8x768xf32, #tpu.memory_space<vmem>>, vector<8x640xf32>
    %c0_47 = arith.constant 0 : index
    %c5 = arith.constant 5 : index
    %78 = vector.load %arg5[%c0_47, %c5] : memref<8x25xf32, #tpu.memory_space<vmem>>, vector<8x1xf32>
    %79 = vector.broadcast %78 : vector<8x1xf32> to vector<8x640xf32>
    %80 = arith.mulf %77, %79 : vector<8x640xf32>
    %81 = arith.addf %76, %80 : vector<8x640xf32>
    %c0_48 = arith.constant 0 : index
    %c21 = arith.constant 21 : index
    %82 = vector.load %arg10[%c0_48, %c21] : memref<8x768xf32, #tpu.memory_space<vmem>>, vector<8x640xf32>
    %c0_49 = arith.constant 0 : index
    %c6 = arith.constant 6 : index
    %83 = vector.load %arg5[%c0_49, %c6] : memref<8x25xf32, #tpu.memory_space<vmem>>, vector<8x1xf32>
    %84 = vector.broadcast %83 : vector<8x1xf32> to vector<8x640xf32>
    %85 = arith.mulf %82, %84 : vector<8x640xf32>
    %86 = arith.addf %81, %85 : vector<8x640xf32>
    %c0_50 = arith.constant 0 : index
    %c22 = arith.constant 22 : index
    %87 = vector.load %arg10[%c0_50, %c22] : memref<8x768xf32, #tpu.memory_space<vmem>>, vector<8x640xf32>
    %c0_51 = arith.constant 0 : index
    %c7 = arith.constant 7 : index
    %88 = vector.load %arg5[%c0_51, %c7] : memref<8x25xf32, #tpu.memory_space<vmem>>, vector<8x1xf32>
    %89 = vector.broadcast %88 : vector<8x1xf32> to vector<8x640xf32>
    %90 = arith.mulf %87, %89 : vector<8x640xf32>
    %91 = arith.addf %86, %90 : vector<8x640xf32>
    %c0_52 = arith.constant 0 : index
    %c23 = arith.constant 23 : index
    %92 = vector.load %arg10[%c0_52, %c23] : memref<8x768xf32, #tpu.memory_space<vmem>>, vector<8x640xf32>
    %c0_53 = arith.constant 0 : index
    %c8 = arith.constant 8 : index
    %93 = vector.load %arg5[%c0_53, %c8] : memref<8x25xf32, #tpu.memory_space<vmem>>, vector<8x1xf32>
    %94 = vector.broadcast %93 : vector<8x1xf32> to vector<8x640xf32>
    %95 = arith.mulf %92, %94 : vector<8x640xf32>
    %96 = arith.addf %91, %95 : vector<8x640xf32>
    %c0_54 = arith.constant 0 : index
    %c24 = arith.constant 24 : index
    %97 = vector.load %arg10[%c0_54, %c24] : memref<8x768xf32, #tpu.memory_space<vmem>>, vector<8x640xf32>
    %c0_55 = arith.constant 0 : index
    %c9 = arith.constant 9 : index
    %98 = vector.load %arg5[%c0_55, %c9] : memref<8x25xf32, #tpu.memory_space<vmem>>, vector<8x1xf32>
    %99 = vector.broadcast %98 : vector<8x1xf32> to vector<8x640xf32>
    %100 = arith.mulf %97, %99 : vector<8x640xf32>
    %101 = arith.addf %96, %100 : vector<8x640xf32>
    %c0_56 = arith.constant 0 : index
    %c40 = arith.constant 40 : index
    %102 = vector.load %arg10[%c0_56, %c40] : memref<8x768xf32, #tpu.memory_space<vmem>>, vector<8x640xf32>
    %c0_57 = arith.constant 0 : index
    %c10 = arith.constant 10 : index
    %103 = vector.load %arg5[%c0_57, %c10] : memref<8x25xf32, #tpu.memory_space<vmem>>, vector<8x1xf32>
    %104 = vector.broadcast %103 : vector<8x1xf32> to vector<8x640xf32>
    %105 = arith.mulf %102, %104 : vector<8x640xf32>
    %106 = arith.addf %101, %105 : vector<8x640xf32>
    %c0_58 = arith.constant 0 : index
    %c41 = arith.constant 41 : index
    %107 = vector.load %arg10[%c0_58, %c41] : memref<8x768xf32, #tpu.memory_space<vmem>>, vector<8x640xf32>
    %c0_59 = arith.constant 0 : index
    %c11 = arith.constant 11 : index
    %108 = vector.load %arg5[%c0_59, %c11] : memref<8x25xf32, #tpu.memory_space<vmem>>, vector<8x1xf32>
    %109 = vector.broadcast %108 : vector<8x1xf32> to vector<8x640xf32>
    %110 = arith.mulf %107, %109 : vector<8x640xf32>
    %111 = arith.addf %106, %110 : vector<8x640xf32>
    %c0_60 = arith.constant 0 : index
    %c42 = arith.constant 42 : index
    %112 = vector.load %arg10[%c0_60, %c42] : memref<8x768xf32, #tpu.memory_space<vmem>>, vector<8x640xf32>
    %c0_61 = arith.constant 0 : index
    %c12 = arith.constant 12 : index
    %113 = vector.load %arg5[%c0_61, %c12] : memref<8x25xf32, #tpu.memory_space<vmem>>, vector<8x1xf32>
    %114 = vector.broadcast %113 : vector<8x1xf32> to vector<8x640xf32>
    %115 = arith.mulf %112, %114 : vector<8x640xf32>
    %116 = arith.addf %111, %115 : vector<8x640xf32>
    %c0_62 = arith.constant 0 : index
    %c43 = arith.constant 43 : index
    %117 = vector.load %arg10[%c0_62, %c43] : memref<8x768xf32, #tpu.memory_space<vmem>>, vector<8x640xf32>
    %c0_63 = arith.constant 0 : index
    %c13 = arith.constant 13 : index
    %118 = vector.load %arg5[%c0_63, %c13] : memref<8x25xf32, #tpu.memory_space<vmem>>, vector<8x1xf32>
    %119 = vector.broadcast %118 : vector<8x1xf32> to vector<8x640xf32>
    %120 = arith.mulf %117, %119 : vector<8x640xf32>
    %121 = arith.addf %116, %120 : vector<8x640xf32>
    %c0_64 = arith.constant 0 : index
    %c44 = arith.constant 44 : index
    %122 = vector.load %arg10[%c0_64, %c44] : memref<8x768xf32, #tpu.memory_space<vmem>>, vector<8x640xf32>
    %c0_65 = arith.constant 0 : index
    %c14 = arith.constant 14 : index
    %123 = vector.load %arg5[%c0_65, %c14] : memref<8x25xf32, #tpu.memory_space<vmem>>, vector<8x1xf32>
    %124 = vector.broadcast %123 : vector<8x1xf32> to vector<8x640xf32>
    %125 = arith.mulf %122, %124 : vector<8x640xf32>
    %126 = arith.addf %121, %125 : vector<8x640xf32>
    %c0_66 = arith.constant 0 : index
    %c60 = arith.constant 60 : index
    %127 = vector.load %arg10[%c0_66, %c60] : memref<8x768xf32, #tpu.memory_space<vmem>>, vector<8x640xf32>
    %c0_67 = arith.constant 0 : index
    %c15 = arith.constant 15 : index
    %128 = vector.load %arg5[%c0_67, %c15] : memref<8x25xf32, #tpu.memory_space<vmem>>, vector<8x1xf32>
    %129 = vector.broadcast %128 : vector<8x1xf32> to vector<8x640xf32>
    %130 = arith.mulf %127, %129 : vector<8x640xf32>
    %131 = arith.addf %126, %130 : vector<8x640xf32>
    %c0_68 = arith.constant 0 : index
    %c61 = arith.constant 61 : index
    %132 = vector.load %arg10[%c0_68, %c61] : memref<8x768xf32, #tpu.memory_space<vmem>>, vector<8x640xf32>
    %c0_69 = arith.constant 0 : index
    %c16 = arith.constant 16 : index
    %133 = vector.load %arg5[%c0_69, %c16] : memref<8x25xf32, #tpu.memory_space<vmem>>, vector<8x1xf32>
    %134 = vector.broadcast %133 : vector<8x1xf32> to vector<8x640xf32>
    %135 = arith.mulf %132, %134 : vector<8x640xf32>
    %136 = arith.addf %131, %135 : vector<8x640xf32>
    %c0_70 = arith.constant 0 : index
    %c62 = arith.constant 62 : index
    %137 = vector.load %arg10[%c0_70, %c62] : memref<8x768xf32, #tpu.memory_space<vmem>>, vector<8x640xf32>
    %c0_71 = arith.constant 0 : index
    %c17 = arith.constant 17 : index
    %138 = vector.load %arg5[%c0_71, %c17] : memref<8x25xf32, #tpu.memory_space<vmem>>, vector<8x1xf32>
    %139 = vector.broadcast %138 : vector<8x1xf32> to vector<8x640xf32>
    %140 = arith.mulf %137, %139 : vector<8x640xf32>
    %141 = arith.addf %136, %140 : vector<8x640xf32>
    %c0_72 = arith.constant 0 : index
    %c63 = arith.constant 63 : index
    %142 = vector.load %arg10[%c0_72, %c63] : memref<8x768xf32, #tpu.memory_space<vmem>>, vector<8x640xf32>
    %c0_73 = arith.constant 0 : index
    %c18 = arith.constant 18 : index
    %143 = vector.load %arg5[%c0_73, %c18] : memref<8x25xf32, #tpu.memory_space<vmem>>, vector<8x1xf32>
    %144 = vector.broadcast %143 : vector<8x1xf32> to vector<8x640xf32>
    %145 = arith.mulf %142, %144 : vector<8x640xf32>
    %146 = arith.addf %141, %145 : vector<8x640xf32>
    %c0_74 = arith.constant 0 : index
    %c64 = arith.constant 64 : index
    %147 = vector.load %arg10[%c0_74, %c64] : memref<8x768xf32, #tpu.memory_space<vmem>>, vector<8x640xf32>
    %c0_75 = arith.constant 0 : index
    %c19 = arith.constant 19 : index
    %148 = vector.load %arg5[%c0_75, %c19] : memref<8x25xf32, #tpu.memory_space<vmem>>, vector<8x1xf32>
    %149 = vector.broadcast %148 : vector<8x1xf32> to vector<8x640xf32>
    %150 = arith.mulf %147, %149 : vector<8x640xf32>
    %151 = arith.addf %146, %150 : vector<8x640xf32>
    %c0_76 = arith.constant 0 : index
    %c80 = arith.constant 80 : index
    %152 = vector.load %arg10[%c0_76, %c80] : memref<8x768xf32, #tpu.memory_space<vmem>>, vector<8x640xf32>
    %c0_77 = arith.constant 0 : index
    %c20_78 = arith.constant 20 : index
    %153 = vector.load %arg5[%c0_77, %c20_78] : memref<8x25xf32, #tpu.memory_space<vmem>>, vector<8x1xf32>
    %154 = vector.broadcast %153 : vector<8x1xf32> to vector<8x640xf32>
    %155 = arith.mulf %152, %154 : vector<8x640xf32>
    %156 = arith.addf %151, %155 : vector<8x640xf32>
    %c0_79 = arith.constant 0 : index
    %c81 = arith.constant 81 : index
    %157 = vector.load %arg10[%c0_79, %c81] : memref<8x768xf32, #tpu.memory_space<vmem>>, vector<8x640xf32>
    %c0_80 = arith.constant 0 : index
    %c21_81 = arith.constant 21 : index
    %158 = vector.load %arg5[%c0_80, %c21_81] : memref<8x25xf32, #tpu.memory_space<vmem>>, vector<8x1xf32>
    %159 = vector.broadcast %158 : vector<8x1xf32> to vector<8x640xf32>
    %160 = arith.mulf %157, %159 : vector<8x640xf32>
    %161 = arith.addf %156, %160 : vector<8x640xf32>
    %c0_82 = arith.constant 0 : index
    %c82 = arith.constant 82 : index
    %162 = vector.load %arg10[%c0_82, %c82] : memref<8x768xf32, #tpu.memory_space<vmem>>, vector<8x640xf32>
    %c0_83 = arith.constant 0 : index
    %c22_84 = arith.constant 22 : index
    %163 = vector.load %arg5[%c0_83, %c22_84] : memref<8x25xf32, #tpu.memory_space<vmem>>, vector<8x1xf32>
    %164 = vector.broadcast %163 : vector<8x1xf32> to vector<8x640xf32>
    %165 = arith.mulf %162, %164 : vector<8x640xf32>
    %166 = arith.addf %161, %165 : vector<8x640xf32>
    %c0_85 = arith.constant 0 : index
    %c83 = arith.constant 83 : index
    %167 = vector.load %arg10[%c0_85, %c83] : memref<8x768xf32, #tpu.memory_space<vmem>>, vector<8x640xf32>
    %c0_86 = arith.constant 0 : index
    %c23_87 = arith.constant 23 : index
    %168 = vector.load %arg5[%c0_86, %c23_87] : memref<8x25xf32, #tpu.memory_space<vmem>>, vector<8x1xf32>
    %169 = vector.broadcast %168 : vector<8x1xf32> to vector<8x640xf32>
    %170 = arith.mulf %167, %169 : vector<8x640xf32>
    %171 = arith.addf %166, %170 : vector<8x640xf32>
    %c0_88 = arith.constant 0 : index
    %c84 = arith.constant 84 : index
    %172 = vector.load %arg10[%c0_88, %c84] : memref<8x768xf32, #tpu.memory_space<vmem>>, vector<8x640xf32>
    %c0_89 = arith.constant 0 : index
    %c24_90 = arith.constant 24 : index
    %173 = vector.load %arg5[%c0_89, %c24_90] : memref<8x25xf32, #tpu.memory_space<vmem>>, vector<8x1xf32>
    %174 = vector.broadcast %173 : vector<8x1xf32> to vector<8x640xf32>
    %175 = arith.mulf %172, %174 : vector<8x640xf32>
    %176 = arith.addf %171, %175 : vector<8x640xf32>
    %cst_91 = arith.constant 5.000000e-01 : f32
    %177 = vector.broadcast %cst_91 : f32 to vector<8x640xf32>
    %178 = arith.mulf %177, %176 : vector<8x640xf32>
    %cst_92 = arith.constant 4.471500e-02 : f32
    %179 = vector.broadcast %cst_92 : f32 to vector<8x640xf32>
    %180 = arith.mulf %179, %176 : vector<8x640xf32>
    %181 = arith.mulf %180, %176 : vector<8x640xf32>
    %182 = arith.mulf %181, %176 : vector<8x640xf32>
    %183 = arith.addf %176, %182 : vector<8x640xf32>
    %cst_93 = arith.constant 0.797884583 : f32
    %184 = vector.broadcast %cst_93 : f32 to vector<8x640xf32>
    %185 = arith.mulf %184, %183 : vector<8x640xf32>
    %186 = math.tanh %185 : vector<8x640xf32>
    %cst_94 = arith.constant 1.000000e+00 : f32
    %187 = vector.broadcast %cst_94 : f32 to vector<8x640xf32>
    %188 = arith.addf %187, %186 : vector<8x640xf32>
    %189 = arith.mulf %178, %188 : vector<8x640xf32>
    %c0_95 = arith.constant 0 : index
    %c0_96 = arith.constant 0 : index
    %c0_97 = arith.constant 0 : index
    %190 = vector.load %arg8[%c0_95, %c0_96, %c0_97] : memref<1x8x640xf32, #tpu.memory_space<vmem>>, vector<1x8x640xf32>
    %191 = vector.shape_cast %190 : vector<1x8x640xf32> to vector<8x640xf32>
    %192 = vector.shape_cast %189 : vector<8x640xf32> to vector<1x8x640xf32>
    tpu.vector_store %arg8[%c0_95, %c0_96, %c0_97], %192 {strides = array<i32>} : memref<1x8x640xf32, #tpu.memory_space<vmem>>, vector<1x8x640xf32>,
    %193 = vector.extract_strided_slice %3 {offsets = [0, 42], sizes = [1, 640], strides = [1, 1]} : vector<1x768xf32> to vector<1x640xf32>
    %194 = vector.broadcast %193 : vector<1x640xf32> to vector<8x640xf32>
    %195 = arith.mulf %189, %194 : vector<8x640xf32>
    %cst_98 = arith.constant dense<0.000000e+00> : vector<8xf32>
    %196 = vector.multi_reduction <add>, %195, %cst_98 [1] : vector<8x640xf32> to vector<8xf32>
    %197 = vector.shape_cast %196 : vector<8xf32> to vector<8x1xf32>
    %cst_99 = arith.constant 0.000000e+00 : f32
    %198 = vector.broadcast %cst_99 : f32 to vector<8x128xf32>
    %199 = vector.broadcast %197 : vector<8x1xf32> to vector<8x128xf32>
    %200 = arith.addf %199, %198 : vector<8x128xf32>
    %c0_100 = arith.constant 0 : index
    %c0_101 = arith.constant 0 : index
    %c0_102 = arith.constant 0 : index
    %c0_103 = arith.constant 0 : index
    %201 = vector.load %arg9[%c0_100, %c0_101, %c0_102, %c0_103] : memref<1x1x8x128xf32, #tpu.memory_space<vmem>>, vector<1x1x8x128xf32>
    %202 = vector.shape_cast %201 : vector<1x1x8x128xf32> to vector<8x128xf32>
    %203 = vector.shape_cast %200 : vector<8x128xf32> to vector<1x1x8x128xf32>
    tpu.vector_store %arg9[%c0_100, %c0_101, %c0_102, %c0_103], %203 {strides = array<i32>} : memref<1x1x8x128xf32, #tpu.memory_space<vmem>>, vector<1x1x8x128xf32>,
    return
  }
  func.func @transform_0(%arg0: i32, %arg1: i32) -> (i32, i32, i32, i32) {
    %c0_i32 = arith.constant 0 : i32
    %c0_i32_0 = arith.constant 0 : i32
    %c0_i32_1 = arith.constant 0 : i32
    return %arg0, %arg1, %c0_i32, %c0_i32_0 : i32, i32, i32, i32
  }
  func.func @transform_1(%arg0: i32, %arg1: i32) -> (i32, i32, i32) {
    %c0_i32 = arith.constant 0 : i32
    %c0_i32_0 = arith.constant 0 : i32
    %c0_i32_1 = arith.constant 0 : i32
    return %arg1, %c0_i32, %c0_i32_0 : i32, i32, i32
  }
  func.func @transform_2(%arg0: i32, %arg1: i32) -> (i32, i32) {
    %c0_i32 = arith.constant 0 : i32
    %c0_i32_0 = arith.constant 0 : i32
    %c0_i32_1 = arith.constant 0 : i32
    return %c0_i32, %c0_i32_0 : i32, i32
  }
  func.func @transform_3(%arg0: i32, %arg1: i32) -> (i32, i32) {
    %c0_i32 = arith.constant 0 : i32
    %c0_i32_0 = arith.constant 0 : i32
    %c0_i32_1 = arith.constant 0 : i32
    return %c0_i32, %c0_i32_0 : i32, i32
  }
  func.func @transform_4(%arg0: i32, %arg1: i32) -> (i32, i32) {
    %c0_i32 = arith.constant 0 : i32
    %c0_i32_0 = arith.constant 0 : i32
    %c0_i32_1 = arith.constant 0 : i32
    return %c0_i32, %c0_i32_0 : i32, i32
  }
  func.func @transform_5(%arg0: i32, %arg1: i32) -> (i32, i32, i32, i32) {
    %c0_i32 = arith.constant 0 : i32
    %c0_i32_0 = arith.constant 0 : i32
    %c0_i32_1 = arith.constant 0 : i32
    return %arg0, %arg1, %c0_i32, %c0_i32_0 : i32, i32, i32, i32
  }
  func.func @transform_6(%arg0: i32, %arg1: i32) -> (i32, i32, i32) {
    %c0_i32 = arith.constant 0 : i32
    %c0_i32_0 = arith.constant 0 : i32
    return %arg0, %c0_i32, %arg1 : i32, i32, i32
  }
  func.func @transform_7(%arg0: i32, %arg1: i32) -> (i32, i32, i32, i32) {
    %c0_i32 = arith.constant 0 : i32
    %c0_i32_0 = arith.constant 0 : i32
    %c0_i32_1 = arith.constant 0 : i32
    return %arg0, %arg1, %c0_i32, %c0_i32_0 : i32, i32, i32, i32
  }
}

</mosaic_0001>

<llo_original>
// kernel: tpu_custom_call.1
$region0: #{tpu_custom_call.1}
  #allocation0 [shape = 'u32[]', space=smem, size = 0x4, offset = 0x4, fixed_abs, tag = 'smem constant byte address 0x4 - core index']
  #allocation1 [shape = 'u32[72,128]{1,0:T(1,128)}', space=vmem, size = 0x9000, scoped, tag = 'internal scratch']
  #allocation2 [shape = 'f32[8,768]{1,0:T(8,128)}', space=vmem, size = 0x6000, scoped, tag = 'scratch operand']
  %s0 = inlined_call_operand.hbm [shape: bf16[2,1,8,768], index: 0, kind: input, shape index: {}]
  %s1 = inlined_call_operand.hbm [shape: f32[1,1,768], index: 1, kind: input, shape index: {}]
  %s2 = inlined_call_operand.hbm [shape: bf16[8,8], index: 2, kind: input, shape index: {}]
  %s3 = inlined_call_operand.hbm [shape: f32[8,25], index: 3, kind: input, shape index: {}]
  %s4 = inlined_call_operand.hbm [shape: f32[8,10], index: 4, kind: input, shape index: {}]
  %s5 = inlined_call_operand.hbm [shape: bf16[2,1,8,768], index: 5, kind: output, shape index: {0}]
  %s6 = inlined_call_operand.hbm [shape: f32[2,8,640], index: 6, kind: output, shape index: {1}]
  %s7 = inlined_call_operand.hbm [shape: f32[2,1,8,128], index: 7, kind: output, shape index: {2}]
  %8 = xla_tuple %s5, %s6, %s7
  %s9 = sld [smem:[#allocation0]]
  $region89: #{tpu_custom_call.1} parent=0
    _
  %s11 = ssub.s32 1, %s9
  %s12 = scalar_select 0, %s11, %s9
  $region1: #{tpu_custom_call.1} parent=0
    #allocation3 [shape = 'u8[24576]{0}', space=vmem, size = 0x6000, scoped, tag = 'input window, operand 0']
    #allocation4 [shape = 's32[2]{0}', space=sflag, size = 0x8, scoped, tag = 'scoped memory for tpu_custom_call.1']
    #allocation5 [shape = 's32[2]{0}', space=sflag, size = 0x8, scoped, tag = 'scoped memory for tpu_custom_call.1']
    #allocation6 [shape = 'u8[3072]{0}', space=vmem, size = 0xc00, scoped, tag = 'input window, operand 1, single buffered']
    #allocation7 [shape = 's32[1]{0}', space=sflag, size = 0x4, scoped, tag = 'scoped memory for tpu_custom_call.1']
    #allocation8 [shape = 'u8[2048]{0}', space=vmem, size = 0x800, scoped, tag = 'input window, operand 2, single buffered']
    #allocation9 [shape = 'u8[4096]{0}', space=vmem, size = 0x1000, scoped, tag = 'input window, operand 3, single buffered']
    #allocation10 [shape = 's32[1]{0}', space=sflag, size = 0x4, scoped, tag = 'scoped memory for tpu_custom_call.1']
    #allocation11 [shape = 'u8[4096]{0}', space=vmem, size = 0x1000, scoped, tag = 'input window, operand 4, single buffered']
    #allocation12 [shape = 'u8[24576]{0}', space=vmem, size = 0x6000, scoped, tag = 'output window, operand 0']
    #allocation13 [shape = 'u8[40960]{0}', space=vmem, size = 0xa000, scoped, tag = 'output window, operand 1']
    #allocation14 [shape = 's32[2]{0}', space=sflag, size = 0x8, scoped, tag = 'scoped memory for tpu_custom_call.1']
    #allocation15 [shape = 'u8[8192]{0}', space=vmem, size = 0x2000, scoped, tag = 'output window, operand 2']
    %13 = vsyncpa [#allocation4], 0
    %s14 = scalar_lea.sflag [#allocation4], 1
    %15 = vsyncpa %s14, 0
    %16 = vsyncpa [#allocation7], 0
    %17 = vsyncpa [#allocation10], 0
    %18 = vsyncpa [#allocation5], 0
    %s19 = scalar_lea.sflag [#allocation5], 1
    %20 = vsyncpa %s19, 0
    %21 = vsyncpa [#allocation14], 0
    %s22 = scalar_lea.sflag [#allocation14], 1
    %23 = vsyncpa %s22, 0
    loop: start=0, step=1, limit=4
    $region2: #{tpu_custom_call.1} parent=1 // loop_pre_header
      _
    $region3: #{tpu_custom_call.1} parent=1 // loop_header
      %s25 = sphi 0, %s29
      %p26 = scmp.ge.s32.totalorder %s25, 4
      %s32 = sphi 0, %s44
      %s33 = sphi 0, %s40
      %s34 = sphi 0, %s32
      %s35 = sphi 0, %s33
      %s36 = sphi 0, %s34
      %s37 = sphi 0, %s35
      %s49 = sphi 0, %s51
      %s52 = sphi 0, %s49
      %s53 = sphi 0, %s52
      %s69 = sphi 0, %s53
      %s75 = sphi 0, %s77
      %s78 = sphi 0, %s75
      %s79 = sphi 0, %s78
      %s95 = sphi 0, %s79
      %s99 = sphi 0, %s99
      %s101 = sphi 0, %s99
      %s102 = sphi 0, %s101
      %s116 = sphi 0, %s102
      %s120 = sphi 0, %s120
      %s122 = sphi 0, %s120
      %s123 = sphi 0, %s122
      %s137 = sphi 0, %s123
      %s141 = sphi 0, %s141
      %s143 = sphi 0, %s141
      %s144 = sphi 0, %s143
      %s158 = sphi 0, %s144
      %s166 = sphi 0, %s168
      %s169 = sphi 0, %s166
      %s170 = sphi 0, %s169
      %s186 = sphi 0, %s170
      %s194 = sphi 0, %s196
      %s197 = sphi 0, %s194
      %s198 = sphi 0, %s197
      %s214 = sphi 0, %s198
      %s222 = sphi 0, %s224
      %s225 = sphi 0, %s222
      %s226 = sphi 0, %s225
      %s242 = sphi 0, %s226
    $region4: #{tpu_custom_call.1} parent=1 // loop_header_branch
      %28 = sbr.rel (%p26) target = $region8
    $region5: #{tpu_custom_call.1} parent=1 // loop_body
      %s30 = ssub.s32 %s25, 1
      %s31 = ssub.s32 %s25, 2
      %s38 = sadd.s32 1, %s33
      %p39 = scmp.ge.s32.totalorder %s38, 1
      %s40 = scalar_select %p39, 0, %s38
      %s41 = sadd.s32 1, %s32
      %s42 = scalar_select %p39, %s41, %s32
      %p43 = scmp.ge.s32.totalorder %s42, 2
      %s44 = scalar_select %p43, 0, %s42
      %s45 = ssub.s32 %s32, %s44
      %s46 = ssub.s32 %s33, %s40
      %s47 = sor.u32 %s45, %s46
      %p48 = scmp.eq.s32.totalorder %s47, 0
      %s50 = sadd.s32 %s49, 1
      %s51 = scalar_select %p48, %s49, %s50
      %p54 = pneg %p48
      %p55 = scmp.eq.s32.totalorder %s25, 1
      %p56 = por %p54, %p55
      %p57 = scmp.ne.s32.totalorder %s49, %s52
      %p58 = scmp.eq.s32.totalorder %s25, 0
      %p59 = por %p57, %p58
      %p60 = scmp.ne.s32.totalorder %s49, %s52
      %p61 = scmp.eq.s32.totalorder %s30, 1
      %p62 = por %p60, %p61
      %p63 = scmp.ne.s32.totalorder %s52, %s53
      %p64 = scmp.eq.s32.totalorder %s30, 0
      %p65 = por %p63, %p64
      %p66 = scmp.ne.s32.totalorder %s52, %s53
      %p67 = scmp.eq.s32.totalorder %s31, 1
      %p68 = por %p66, %p67
      %p70 = scmp.ne.s32.totalorder %s53, %s69
      %p71 = scmp.eq.s32.totalorder %s31, 0
      %p72 = por %p70, %p71
      %s73 = ssub.s32 %s33, %s40
      %p74 = scmp.eq.s32.totalorder %s73, 0
      %s76 = sadd.s32 %s75, 1
      %s77 = scalar_select %p74, %s75, %s76
      %p80 = pneg %p74
      %p81 = scmp.eq.s32.totalorder %s25, 1
      %p82 = por %p80, %p81
      %p83 = scmp.ne.s32.totalorder %s75, %s78
      %p84 = scmp.eq.s32.totalorder %s25, 0
      %p85 = por %p83, %p84
      %p86 = scmp.ne.s32.totalorder %s75, %s78
      %p87 = scmp.eq.s32.totalorder %s30, 1
      %p88 = por %p86, %p87
      %p89 = scmp.ne.s32.totalorder %s78, %s79
      %p90 = scmp.eq.s32.totalorder %s30, 0
      %p91 = por %p89, %p90
      %p92 = scmp.ne.s32.totalorder %s78, %s79
      %p93 = scmp.eq.s32.totalorder %s31, 1
      %p94 = por %p92, %p93
      %p96 = scmp.ne.s32.totalorder %s79, %s95
      %p97 = scmp.eq.s32.totalorder %s31, 0
      %p98 = por %p96, %p97
      %s100 = sadd.s32 %s99, 1
      %p103 = scmp.eq.s32.totalorder %s25, 1
      %p104 = scmp.ne.s32.totalorder %s99, %s101
      %p105 = scmp.eq.s32.totalorder %s25, 0
      %p106 = por %p104, %p105
      %p107 = scmp.ne.s32.totalorder %s99, %s101
      %p108 = scmp.eq.s32.totalorder %s30, 1
      %p109 = por %p107, %p108
      %p110 = scmp.ne.s32.totalorder %s101, %s102
      %p111 = scmp.eq.s32.totalorder %s30, 0
      %p112 = por %p110, %p111
      %p113 = scmp.ne.s32.totalorder %s101, %s102
      %p114 = scmp.eq.s32.totalorder %s31, 1
      %p115 = por %p113, %p114
      %p117 = scmp.ne.s32.totalorder %s102, %s116
      %p118 = scmp.eq.s32.totalorder %s31, 0
      %p119 = por %p117, %p118
      %s121 = sadd.s32 %s120, 1
      %p124 = scmp.eq.s32.totalorder %s25, 1
      %p125 = scmp.ne.s32.totalorder %s120, %s122
      %p126 = scmp.eq.s32.totalorder %s25, 0
      %p127 = por %p125, %p126
      %p128 = scmp.ne.s32.totalorder %s120, %s122
      %p129 = scmp.eq.s32.totalorder %s30, 1
      %p130 = por %p128, %p129
      %p131 = scmp.ne.s32.totalorder %s122, %s123
      %p132 = scmp.eq.s32.totalorder %s30, 0
      %p133 = por %p131, %p132
      %p134 = scmp.ne.s32.totalorder %s122, %s123
      %p135 = scmp.eq.s32.totalorder %s31, 1
      %p136 = por %p134, %p135
      %p138 = scmp.ne.s32.totalorder %s123, %s137
      %p139 = scmp.eq.s32.totalorder %s31, 0
      %p140 = por %p138, %p139
      %s142 = sadd.s32 %s141, 1
      %p145 = scmp.eq.s32.totalorder %s25, 1
      %p146 = scmp.ne.s32.totalorder %s141, %s143
      %p147 = scmp.eq.s32.totalorder %s25, 0
      %p148 = por %p146, %p147
      %p149 = scmp.ne.s32.totalorder %s141, %s143
      %p150 = scmp.eq.s32.totalorder %s30, 1
      %p151 = por %p149, %p150
      %p152 = scmp.ne.s32.totalorder %s143, %s144
      %p153 = scmp.eq.s32.totalorder %s30, 0
      %p154 = por %p152, %p153
      %p155 = scmp.ne.s32.totalorder %s143, %s144
      %p156 = scmp.eq.s32.totalorder %s31, 1
      %p157 = por %p155, %p156
      %p159 = scmp.ne.s32.totalorder %s144, %s158
      %p160 = scmp.eq.s32.totalorder %s31, 0
      %p161 = por %p159, %p160
      %s162 = ssub.s32 %s32, %s44
      %s163 = ssub.s32 %s33, %s40
      %s164 = sor.u32 %s162, %s163
      %p165 = scmp.eq.s32.totalorder %s164, 0
      %s167 = sadd.s32 %s166, 1
      %s168 = scalar_select %p165, %s166, %s167
      %p171 = pneg %p165
      %p172 = scmp.eq.s32.totalorder %s25, 1
      %p173 = por %p171, %p172
      %p174 = scmp.ne.s32.totalorder %s166, %s169
      %p175 = scmp.eq.s32.totalorder %s25, 0
      %p176 = por %p174, %p175
      %p177 = scmp.ne.s32.totalorder %s166, %s169
      %p178 = scmp.eq.s32.totalorder %s30, 1
      %p179 = por %p177, %p178
      %p180 = scmp.ne.s32.totalorder %s169, %s170
      %p181 = scmp.eq.s32.totalorder %s30, 0
      %p182 = por %p180, %p181
      %p183 = scmp.ne.s32.totalorder %s169, %s170
      %p184 = scmp.eq.s32.totalorder %s31, 1
      %p185 = por %p183, %p184
      %p187 = scmp.ne.s32.totalorder %s170, %s186
      %p188 = scmp.eq.s32.totalorder %s31, 0
      %p189 = por %p187, %p188
      %s190 = ssub.s32 %s32, %s44
      %s191 = ssub.s32 %s33, %s40
      %s192 = sor.u32 %s190, %s191
      %p193 = scmp.eq.s32.totalorder %s192, 0
      %s195 = sadd.s32 %s194, 1
      %s196 = scalar_select %p193, %s194, %s195
      %p199 = pneg %p193
      %p200 = scmp.eq.s32.totalorder %s25, 1
      %p201 = por %p199, %p200
      %p202 = scmp.ne.s32.totalorder %s194, %s197
      %p203 = scmp.eq.s32.totalorder %s25, 0
      %p204 = por %p202, %p203
      %p205 = scmp.ne.s32.totalorder %s194, %s197
      %p206 = scmp.eq.s32.totalorder %s30, 1
      %p207 = por %p205, %p206
      %p208 = scmp.ne.s32.totalorder %s197, %s198
      %p209 = scmp.eq.s32.totalorder %s30, 0
      %p210 = por %p208, %p209
      %p211 = scmp.ne.s32.totalorder %s197, %s198
      %p212 = scmp.eq.s32.totalorder %s31, 1
      %p213 = por %p211, %p212
      %p215 = scmp.ne.s32.totalorder %s198, %s214
      %p216 = scmp.eq.s32.totalorder %s31, 0
      %p217 = por %p215, %p216
      %s218 = ssub.s32 %s32, %s44
      %s219 = ssub.s32 %s33, %s40
      %s220 = sor.u32 %s218, %s219
      %p221 = scmp.eq.s32.totalorder %s220, 0
      %s223 = sadd.s32 %s222, 1
      %s224 = scalar_select %p221, %s222, %s223
      %p227 = pneg %p221
      %p228 = scmp.eq.s32.totalorder %s25, 1
      %p229 = por %p227, %p228
      %p230 = scmp.ne.s32.totalorder %s222, %s225
      %p231 = scmp.eq.s32.totalorder %s25, 0
      %p232 = por %p230, %p231
      %p233 = scmp.ne.s32.totalorder %s222, %s225
      %p234 = scmp.eq.s32.totalorder %s30, 1
      %p235 = por %p233, %p234
      %p236 = scmp.ne.s32.totalorder %s225, %s226
      %p237 = scmp.eq.s32.totalorder %s30, 0
      %p238 = por %p236, %p237
      %p239 = scmp.ne.s32.totalorder %s225, %s226
      %p240 = scmp.eq.s32.totalorder %s31, 1
      %p241 = por %p239, %p240
      %p243 = scmp.ne.s32.totalorder %s226, %s242
      %p244 = scmp.eq.s32.totalorder %s31, 0
      %p245 = por %p243, %p244
      %p246 = scmp.le.s32.totalorder 1, %s25
      %p247 = scmp.lt.s32.totalorder %s25, 3
      %p248 = pnand %p246, %p247
      %p249 = pneg %p248
      // Predicated region
      $region9: #{tpu_custom_call.1} parent=5 // pred_check
        _
      $region10: #{tpu_custom_call.1} parent=5 // pred_check_branch
        %251 = sbr.rel (%p248) target = $region12
      $region11: #{tpu_custom_call.1} parent=5 // pred_region
        %s252 = ssub.s32 %s25, 1
        // Predicated region
        $region13: #{tpu_custom_call.1} parent=11 // pred_check
          %p253 = pneg %p91
        $region14: #{tpu_custom_call.1} parent=11 // pred_check_branch
          %255 = sbr.rel (%p253) target = $region16
        $region15: #{tpu_custom_call.1} parent=11 // pred_region
          %257 = vsyncadd [#allocation7], 0
          %s258 = smul.addr %s35, 6
          %s259 = scalar_lea.hbm %s1, %s258
          %s261 = sshll.u32 %s259, 4
          %s262 = int_to_ptr.hbm [resolvable:$true] %s261
          %s263 = sshll.u32 [#allocation6], 4
          %s264 = int_to_ptr.vmem [resolvable:$true] %s263
          %266 = dma.hbm_to_vmem [thread:$0]  %s262, 96, %s264, [#allocation7]
        $region16: #{tpu_custom_call.1} parent=11 // pred_fallthru
          _
        // Predicated region
        $region17: #{tpu_custom_call.1} parent=11 // pred_check
          %p267 = pneg %p112
        $region18: #{tpu_custom_call.1} parent=11 // pred_check_branch
          %269 = sbr.rel (%p267) target = $region20
        $region19: #{tpu_custom_call.1} parent=11 // pred_region
          %271 = vsyncadd [#allocation7], 0
          %s273 = sshll.u32 %s2, 4
          %s274 = int_to_ptr.hbm [resolvable:$true] %s273
          %s275 = sshll.u32 [#allocation8], 4
          %s276 = int_to_ptr.vmem [resolvable:$true] %s275
          %278 = dma.hbm_to_vmem [thread:$0]  %s274, 64, %s276, [#allocation7]
        $region20: #{tpu_custom_call.1} parent=11 // pred_fallthru
          _
        // Predicated region
        $region21: #{tpu_custom_call.1} parent=11 // pred_check
          %p279 = pneg %p133
        $region22: #{tpu_custom_call.1} parent=11 // pred_check_branch
          %281 = sbr.rel (%p279) target = $region24
        $region23: #{tpu_custom_call.1} parent=11 // pred_region
          %283 = vsyncadd [#allocation10], 0
          %s285 = sshll.u32 %s3, 4
          %s286 = int_to_ptr.hbm [resolvable:$true] %s285
          %s287 = sshll.u32 [#allocation9], 4
          %s288 = int_to_ptr.vmem [resolvable:$true] %s287
          %290 = dma.hbm_to_vmem [thread:$0]  %s286, 128, %s288, [#allocation10]
        $region24: #{tpu_custom_call.1} parent=11 // pred_fallthru
          _
        // Predicated region
        $region25: #{tpu_custom_call.1} parent=11 // pred_check
          %p291 = pneg %p154
        $region26: #{tpu_custom_call.1} parent=11 // pred_check_branch
          %293 = sbr.rel (%p291) target = $region28
        $region27: #{tpu_custom_call.1} parent=11 // pred_region
          %295 = vsyncadd [#allocation10], 0
          %s297 = sshll.u32 %s4, 4
          %s298 = int_to_ptr.hbm [resolvable:$true] %s297
          %s299 = sshll.u32 [#allocation11], 4
          %s300 = int_to_ptr.vmem [resolvable:$true] %s299
          %302 = dma.hbm_to_vmem [thread:$0]  %s298, 128, %s300, [#allocation10]
        $region28: #{tpu_custom_call.1} parent=11 // pred_fallthru
          _
      $region12: #{tpu_custom_call.1} parent=5 // pred_fallthru
        _
      %p303 = scmp.lt.s32.totalorder %s25, 2
      // Predicated region
      $region29: #{tpu_custom_call.1} parent=5 // pred_check
        %p304 = pneg %p303
      $region30: #{tpu_custom_call.1} parent=5 // pred_check_branch
        %306 = sbr.rel (%p304) target = $region32
      $region31: #{tpu_custom_call.1} parent=5 // pred_region
        // Predicated region
        $region33: #{tpu_custom_call.1} parent=31 // pred_check
          %p307 = pneg %p59
        $region34: #{tpu_custom_call.1} parent=31 // pred_check_branch
          %309 = sbr.rel (%p307) target = $region36
        $region35: #{tpu_custom_call.1} parent=31 // pred_region
          %s310 = sand.u32 %s49, 1
          %s311 = scalar_lea.sflag [#allocation4], %s310
          %s312 = sand.u32 %s49, 1
          %s313 = smul.addr %s312, 24
          %s314 = scalar_lea.vmem [#allocation3], %s313
          %316 = vsyncadd %s311, 0
          %s317 = smul.addr %s33, 6
          %s318 = smul.addr %s32, 6
          %s319 = sadd.s32 %s317, %s318
          %s320 = smul.addr %s319, 4
          %s321 = scalar_lea.hbm %s0, %s320
          %s323 = sshll.u32 %s321, 4
          %s324 = int_to_ptr.hbm [resolvable:$true] %s323
          %s325 = sshll.u32 %s314, 4
          %s326 = int_to_ptr.vmem [resolvable:$true] %s325
          %328 = dma.hbm_to_vmem [thread:$0]  %s324, 384, %s326, %s311
        $region36: #{tpu_custom_call.1} parent=31 // pred_fallthru
          _
      $region32: #{tpu_custom_call.1} parent=5 // pred_fallthru
        _
      %p329 = scmp.le.s32.totalorder 1, %s25
      %p330 = scmp.lt.s32.totalorder %s25, 3
      %p331 = pnand %p329, %p330
      %p332 = pneg %p331
      // Predicated region
      $region37: #{tpu_custom_call.1} parent=5 // pred_check
        _
      $region38: #{tpu_custom_call.1} parent=5 // pred_check_branch
        %334 = sbr.rel (%p331) target = $region40
      $region39: #{tpu_custom_call.1} parent=5 // pred_region
        %s335 = ssub.s32 %s25, 1
        %s336 = sand.u32 %s52, 1
        %s337 = scalar_lea.sflag [#allocation4], %s336
        %s338 = sand.u32 %s52, 1
        %s339 = smul.addr %s338, 24
        %s340 = scalar_lea.vmem [#allocation3], %s339
        // Predicated region
        $region41: #{tpu_custom_call.1} parent=39 // pred_check
          %p341 = pneg %p65
        $region42: #{tpu_custom_call.1} parent=39 // pred_check_branch
          %343 = sbr.rel (%p341) target = $region44
        $region43: #{tpu_custom_call.1} parent=39 // pred_region
          %345 = dma.done %s337, 384
        $region44: #{tpu_custom_call.1} parent=39 // pred_fallthru
          _
        // Predicated region
        $region45: #{tpu_custom_call.1} parent=39 // pred_check
          %p346 = pneg %p91
        $region46: #{tpu_custom_call.1} parent=39 // pred_check_branch
          %348 = sbr.rel (%p346) target = $region48
        $region47: #{tpu_custom_call.1} parent=39 // pred_region
          %350 = dma.done [#allocation7], 96
        $region48: #{tpu_custom_call.1} parent=39 // pred_fallthru
          _
        // Predicated region
        $region49: #{tpu_custom_call.1} parent=39 // pred_check
          %p351 = pneg %p112
        $region50: #{tpu_custom_call.1} parent=39 // pred_check_branch
          %353 = sbr.rel (%p351) target = $region52
        $region51: #{tpu_custom_call.1} parent=39 // pred_region
          %355 = dma.done [#allocation7], 64
        $region52: #{tpu_custom_call.1} parent=39 // pred_fallthru
          _
        // Predicated region
        $region53: #{tpu_custom_call.1} parent=39 // pred_check
          %p356 = pneg %p133
        $region54: #{tpu_custom_call.1} parent=39 // pred_check_branch
          %358 = sbr.rel (%p356) target = $region56
        $region55: #{tpu_custom_call.1} parent=39 // pred_region
          %360 = dma.done [#allocation10], 128
        $region56: #{tpu_custom_call.1} parent=39 // pred_fallthru
          _
        // Predicated region
        $region57: #{tpu_custom_call.1} parent=39 // pred_check
          %p361 = pneg %p154
        $region58: #{tpu_custom_call.1} parent=39 // pred_check_branch
          %363 = sbr.rel (%p361) target = $region60
        $region59: #{tpu_custom_call.1} parent=39 // pred_region
          %365 = dma.done [#allocation10], 128
        $region60: #{tpu_custom_call.1} parent=39 // pred_fallthru
          _
        %s366 = sand.u32 %s52, 1
        %s367 = scalar_lea.sflag [#allocation4], %s366
        %s368 = sand.u32 %s52, 1
        %s369 = smul.addr %s368, 24
        %s370 = scalar_lea.vmem [#allocation3], %s369
        %p371 = pneg %p65
        %p372 = pneg %p62
        %p373 = pneg %p91
        %p374 = pneg %p88
        %p375 = pneg %p112
        %p376 = pneg %p109
        %p377 = pneg %p133
        %p378 = pneg %p130
        %p379 = pneg %p154
        %p380 = pneg %p151
        %p381 = pneg %p182
        %p382 = pneg %p179
        %s383 = sand.u32 %s169, 1
        %s384 = scalar_lea.sflag [#allocation5], %s383
        %s385 = sand.u32 %s169, 1
        %s386 = smul.addr %s385, 24
        %s387 = scalar_lea.vmem [#allocation12], %s386
        %p388 = pneg %p210
        %p389 = pneg %p207
        %s390 = sand.u32 %s30, 1
        %s391 = scalar_lea.sflag [#allocation14], %s390
        %s392 = sand.u32 %s197, 1
        %s393 = smul.addr %s392, 40
        %s394 = scalar_lea.vmem [#allocation13], %s393
        %p395 = pneg %p238
        %p396 = pneg %p235
        %s397 = sand.u32 %s30, 1
        %s398 = scalar_lea.sflag [#allocation14], %s397
        %s399 = sand.u32 %s225, 1
        %s400 = smul.addr %s399, 8
        %s401 = scalar_lea.vmem [#allocation15], %s400
        %s402 = smul.u32 5, %s35
        %v404 = vld [vmem:[%s340] sm:$0xff]
        %v405 = vld [vmem:[%s340 + $0x8] sm:$0xff]
        %v406 = vld [vmem:[%s340 + $0x10] sm:$0xff]
        %v407 = vld [vmem:[#allocation6] sm:$0x3f]
        %v408 = vld [vmem:[#allocation8] sm:$0xf]
        %v409 = vld [vmem:[#allocation11] sm:$0xff]
        %411 = vset.pattern.permute.xlu0 0
        %412 = vperm.xlu0 %411, %v409
        %v413 = vpop.permute.xlu0 %412
        %v418 = vunpack.c.l.b16 %v404
        %v419 = vunpack.c.h.b16 %v404
        %v420 = vunpack.c.l.b16 %v405
        %v421 = vunpack.c.h.b16 %v405
        %v422 = vunpack.c.l.b16 %v406
        %v423 = vunpack.c.h.b16 %v406
        %v424 = vpack.c.b16 %v418, %v418
        %v425 = vpack.c.b16 %v419, %v419
        %v426 = vpack.c.b16 %v420, %v420
        %v427 = vpack.c.b16 %v421, %v421
        %v428 = vpack.c.b16 %v422, %v422
        %v429 = vpack.c.b16 %v423, %v423
        %vm430 = vcmask 64512
        %v432 = vsel %vm430, %v408, 0
        %vm434 = vcmask 1043456
        %v436 = vsel %vm434, %v424, 0
        %v439 = vsel %vm434, %v425, 0
        %v442 = vsel %vm434, %v426, 0
        %v445 = vsel %vm434, %v427, 0
        %v448 = vsel %vm434, %v428, 0
        %v451 = vsel %vm434, %v429, 0
        %453 = vmatpush.bf16.msra.mxu0 0
        %454 = vmatpush.bf16.msra.mxu0 0
        %455 = vmatpush.bf16.msra.mxu0 0
        %456 = vmatpush.bf16.msra.mxu0 0
        %457 = vmatpush.bf16.msra.mxu0 0
        %458 = vmatpush.bf16.msra.mxu0 0
        %459 = vmatpush.bf16.msra.mxu0 0
        %460 = vmatpush.bf16.msra.mxu0 %v436
        %461 = vmatmul.bf16.gmra.mxu0 %v432
        %v462 = vpop.f32.mrf.mxu0
        %v463 = vadd.f32 %v413, %v462
        %v464 = vpop.f32.mrf.mxu0
        %465 = vdwg.mxu0
        %466 = vmatpush.bf16.msra.mxu0 0
        %467 = vmatpush.bf16.msra.mxu0 0
        %468 = vmatpush.bf16.msra.mxu0 0
        %469 = vmatpush.bf16.msra.mxu0 0
        %470 = vmatpush.bf16.msra.mxu0 0
        %471 = vmatpush.bf16.msra.mxu0 0
        %472 = vmatpush.bf16.msra.mxu0 0
        %473 = vmatpush.bf16.msra.mxu0 %v439
        %474 = vmatmul.bf16.gmra.mxu0 %v432
        %v475 = vpop.f32.mrf.mxu0
        %v476 = vadd.f32 %v413, %v475
        %v477 = vpop.f32.mrf.mxu0
        %478 = vdwg.mxu0
        %479 = vmatpush.bf16.msra.mxu0 0
        %480 = vmatpush.bf16.msra.mxu0 0
        %481 = vmatpush.bf16.msra.mxu0 0
        %482 = vmatpush.bf16.msra.mxu0 0
        %483 = vmatpush.bf16.msra.mxu0 0
        %484 = vmatpush.bf16.msra.mxu0 0
        %485 = vmatpush.bf16.msra.mxu0 0
        %486 = vmatpush.bf16.msra.mxu0 %v442
        %487 = vmatmul.bf16.gmra.mxu0 %v432
        %v488 = vpop.f32.mrf.mxu0
        %v489 = vadd.f32 %v413, %v488
        %v490 = vpop.f32.mrf.mxu0
        %491 = vdwg.mxu0
        %492 = vmatpush.bf16.msra.mxu0 0
        %493 = vmatpush.bf16.msra.mxu0 0
        %494 = vmatpush.bf16.msra.mxu0 0
        %495 = vmatpush.bf16.msra.mxu0 0
        %496 = vmatpush.bf16.msra.mxu0 0
        %497 = vmatpush.bf16.msra.mxu0 0
        %498 = vmatpush.bf16.msra.mxu0 0
        %499 = vmatpush.bf16.msra.mxu0 %v445
        %500 = vmatmul.bf16.gmra.mxu0 %v432
        %v501 = vpop.f32.mrf.mxu0
        %v502 = vadd.f32 %v413, %v501
        %v503 = vpop.f32.mrf.mxu0
        %504 = vdwg.mxu0
        %505 = vmatpush.bf16.msra.mxu0 0
        %506 = vmatpush.bf16.msra.mxu0 0
        %507 = vmatpush.bf16.msra.mxu0 0
        %508 = vmatpush.bf16.msra.mxu0 0
        %509 = vmatpush.bf16.msra.mxu0 0
        %510 = vmatpush.bf16.msra.mxu0 0
        %511 = vmatpush.bf16.msra.mxu0 0
        %512 = vmatpush.bf16.msra.mxu0 %v448
        %513 = vmatmul.bf16.gmra.mxu0 %v432
        %v514 = vpop.f32.mrf.mxu0
        %v515 = vadd.f32 %v413, %v514
        %v516 = vpop.f32.mrf.mxu0
        %517 = vdwg.mxu0
        %518 = vmatpush.bf16.msra.mxu0 0
        %519 = vmatpush.bf16.msra.mxu0 0
        %520 = vmatpush.bf16.msra.mxu0 0
        %521 = vmatpush.bf16.msra.mxu0 0
        %522 = vmatpush.bf16.msra.mxu0 0
        %523 = vmatpush.bf16.msra.mxu0 0
        %524 = vmatpush.bf16.msra.mxu0 0
        %525 = vmatpush.bf16.msra.mxu0 %v451
        %526 = vmatmul.bf16.gmra.mxu0 %v432
        %v527 = vpop.f32.mrf.mxu0
        %v528 = vadd.f32 %v413, %v527
        %v529 = vpop.f32.mrf.mxu0
        %530 = vdwg.mxu0
        %v531 = vmul.f32 %v463, 0.5
        %v532 = vmul.f32 %v476, 0.5
        %v533 = vmul.f32 %v489, 0.5
        %v534 = vmul.f32 %v502, 0.5
        %v535 = vmul.f32 %v515, 0.5
        %v536 = vmul.f32 %v528, 0.5
        %v537 = vmul.f32 %v463, 0.044715
        %v538 = vmul.f32 %v476, 0.044715
        %v539 = vmul.f32 %v489, 0.044715
        %v540 = vmul.f32 %v502, 0.044715
        %v541 = vmul.f32 %v515, 0.044715
        %v542 = vmul.f32 %v528, 0.044715
        %v543 = vmul.f32 %v537, %v463
        %v544 = vmul.f32 %v538, %v476
        %v545 = vmul.f32 %v539, %v489
        %v546 = vmul.f32 %v540, %v502
        %v547 = vmul.f32 %v541, %v515
        %v548 = vmul.f32 %v542, %v528
        %v549 = vmul.f32 %v543, %v463
        %v550 = vmul.f32 %v544, %v476
        %v551 = vmul.f32 %v545, %v489
        %v552 = vmul.f32 %v546, %v502
        %v553 = vmul.f32 %v547, %v515
        %v554 = vmul.f32 %v548, %v528
        %v555 = vadd.f32 %v463, %v549
        %v556 = vadd.f32 %v476, %v550
        %v557 = vadd.f32 %v489, %v551
        %v558 = vadd.f32 %v502, %v552
        %v559 = vadd.f32 %v515, %v553
        %v560 = vadd.f32 %v528, %v554
        %v561 = vmul.f32 %v555, 0.7978846
        %v562 = vmul.f32 %v556, 0.7978846
        %v563 = vmul.f32 %v557, 0.7978846
        %v564 = vmul.f32 %v558, 0.7978846
        %v565 = vmul.f32 %v559, 0.7978846
        %v566 = vmul.f32 %v560, 0.7978846
        %v567 = vtanh.pop %v561
        %v568 = vtanh.pop %v562
        %v569 = vtanh.pop %v563
        %v570 = vtanh.pop %v564
        %v571 = vtanh.pop %v565
        %v572 = vtanh.pop %v566
        %v573 = vadd.f32 %v567, 1.0
        %v574 = vadd.f32 %v568, 1.0
        %v575 = vadd.f32 %v569, 1.0
        %v576 = vadd.f32 %v570, 1.0
        %v577 = vadd.f32 %v571, 1.0
        %v578 = vadd.f32 %v572, 1.0
        %v579 = vmul.f32 %v531, %v573
        %v580 = vmul.f32 %v532, %v574
        %v581 = vmul.f32 %v533, %v575
        %v582 = vmul.f32 %v534, %v576
        %v583 = vmul.f32 %v535, %v577
        %v584 = vmul.f32 %v536, %v578
        %v585 = vrot.slane %v579, 4
        %v586 = vadd.f32 %v579, %v585
        %v587 = vrot.slane %v586, 2
        %v588 = vadd.f32 %v586, %v587
        %v589 = vrot.slane %v588, 1
        %v590 = vadd.f32 %v588, %v589
        %v591 = vrot.slane %v580, 4
        %v592 = vadd.f32 %v580, %v591
        %v593 = vrot.slane %v592, 2
        %v594 = vadd.f32 %v592, %v593
        %v595 = vrot.slane %v594, 1
        %v596 = vadd.f32 %v594, %v595
        %v597 = vrot.slane %v581, 4
        %v598 = vadd.f32 %v581, %v597
        %v599 = vrot.slane %v598, 2
        %v600 = vadd.f32 %v598, %v599
        %v601 = vrot.slane %v600, 1
        %v602 = vadd.f32 %v600, %v601
        %v603 = vrot.slane %v582, 4
        %v604 = vadd.f32 %v582, %v603
        %v605 = vrot.slane %v604, 2
        %v606 = vadd.f32 %v604, %v605
        %v607 = vrot.slane %v606, 1
        %v608 = vadd.f32 %v606, %v607
        %v609 = vrot.slane %v583, 4
        %v610 = vadd.f32 %v583, %v609
        %v611 = vrot.slane %v610, 2
        %v612 = vadd.f32 %v610, %v611
        %v613 = vrot.slane %v612, 1
        %v614 = vadd.f32 %v612, %v613
        %v615 = vrot.slane %v584, 4
        %v616 = vadd.f32 %v584, %v615
        %v617 = vrot.slane %v616, 2
        %v618 = vadd.f32 %v616, %v617
        %v619 = vrot.slane %v618, 1
        %v620 = vadd.f32 %v618, %v619
        %v621 = vrcp.pop 8.0
        %v622 = vmul.f32 8.0, %v621
        %v623 = vsub.f32 1.0, %v622
        %v624 = vmul.f32 %v621, %v623
        %v625 = vadd.f32 %v621, %v624
        %vm626 = vweird.f32 %v621
        %v627 = vsel %vm626, %v621, %v625
        %v628 = vmul.f32 %v590, %v627
        %v629 = vmul.f32 %v596, %v627
        %v630 = vmul.f32 %v602, %v627
        %v631 = vmul.f32 %v608, %v627
        %v632 = vmul.f32 %v614, %v627
        %v633 = vmul.f32 %v620, %v627
        %v634 = vsub.f32 %v579, %v628
        %v635 = vsub.f32 %v580, %v629
        %v636 = vsub.f32 %v581, %v630
        %v637 = vsub.f32 %v582, %v631
        %v638 = vsub.f32 %v583, %v632
        %v639 = vsub.f32 %v584, %v633
        %v640 = vmul.f32 %v634, %v634
        %v641 = vmul.f32 %v635, %v635
        %v642 = vmul.f32 %v636, %v636
        %v643 = vmul.f32 %v637, %v637
        %v644 = vmul.f32 %v638, %v638
        %v645 = vmul.f32 %v639, %v639
        %v646 = vrot.slane %v640, 4
        %v647 = vadd.f32 %v640, %v646
        %v648 = vrot.slane %v647, 2
        %v649 = vadd.f32 %v647, %v648
        %v650 = vrot.slane %v649, 1
        %v651 = vadd.f32 %v649, %v650
        %v652 = vrot.slane %v641, 4
        %v653 = vadd.f32 %v641, %v652
        %v654 = vrot.slane %v653, 2
        %v655 = vadd.f32 %v653, %v654
        %v656 = vrot.slane %v655, 1
        %v657 = vadd.f32 %v655, %v656
        %v658 = vrot.slane %v642, 4
        %v659 = vadd.f32 %v642, %v658
        %v660 = vrot.slane %v659, 2
        %v661 = vadd.f32 %v659, %v660
        %v662 = vrot.slane %v661, 1
        %v663 = vadd.f32 %v661, %v662
        %v664 = vrot.slane %v643, 4
        %v665 = vadd.f32 %v643, %v664
        %v666 = vrot.slane %v665, 2
        %v667 = vadd.f32 %v665, %v666
        %v668 = vrot.slane %v667, 1
        %v669 = vadd.f32 %v667, %v668
        %v670 = vrot.slane %v644, 4
        %v671 = vadd.f32 %v644, %v670
        %v672 = vrot.slane %v671, 2
        %v673 = vadd.f32 %v671, %v672
        %v674 = vrot.slane %v673, 1
        %v675 = vadd.f32 %v673, %v674
        %v676 = vrot.slane %v645, 4
        %v677 = vadd.f32 %v645, %v676
        %v678 = vrot.slane %v677, 2
        %v679 = vadd.f32 %v677, %v678
        %v680 = vrot.slane %v679, 1
        %v681 = vadd.f32 %v679, %v680
        %v682 = vmul.f32 %v651, %v627
        %v683 = vmul.f32 %v657, %v627
        %v684 = vmul.f32 %v663, %v627
        %v685 = vmul.f32 %v669, %v627
        %v686 = vmul.f32 %v675, %v627
        %v687 = vmul.f32 %v681, %v627
        %v688 = vadd.f32 %v682, 1e-06
        %v689 = vadd.f32 %v683, 1e-06
        %v690 = vadd.f32 %v684, 1e-06
        %v691 = vadd.f32 %v685, 1e-06
        %v692 = vadd.f32 %v686, 1e-06
        %v693 = vadd.f32 %v687, 1e-06
        %v694 = vrsqrt.pop %v688
        %v695 = vmul.f32 %v694, %v688
        %v696 = vmul.f32 %v695, %v694
        %v697 = vmul.f32 0.5, %v696
        %v698 = vsub.f32 1.5, %v697
        %v699 = vmul.f32 %v694, %v698
        %vm700 = vweird.f32 %v688
        %vm701 = vweird.f32 %v694
        %vm702 = vmor %vm700, %vm701
        %v703 = vsel %vm702, %v694, %v699
        %v704 = vrsqrt.pop %v689
        %v705 = vmul.f32 %v704, %v689
        %v706 = vmul.f32 %v705, %v704
        %v707 = vmul.f32 0.5, %v706
        %v708 = vsub.f32 1.5, %v707
        %v709 = vmul.f32 %v704, %v708
        %vm710 = vweird.f32 %v689
        %vm711 = vweird.f32 %v704
        %vm712 = vmor %vm710, %vm711
        %v713 = vsel %vm712, %v704, %v709
        %v714 = vrsqrt.pop %v690
        %v715 = vmul.f32 %v714, %v690
        %v716 = vmul.f32 %v715, %v714
        %v717 = vmul.f32 0.5, %v716
        %v718 = vsub.f32 1.5, %v717
        %v719 = vmul.f32 %v714, %v718
        %vm720 = vweird.f32 %v690
        %vm721 = vweird.f32 %v714
        %vm722 = vmor %vm720, %vm721
        %v723 = vsel %vm722, %v714, %v719
        %v724 = vrsqrt.pop %v691
        %v725 = vmul.f32 %v724, %v691
        %v726 = vmul.f32 %v725, %v724
        %v727 = vmul.f32 0.5, %v726
        %v728 = vsub.f32 1.5, %v727
        %v729 = vmul.f32 %v724, %v728
        %vm730 = vweird.f32 %v691
        %vm731 = vweird.f32 %v724
        %vm732 = vmor %vm730, %vm731
        %v733 = vsel %vm732, %v724, %v729
        %v734 = vrsqrt.pop %v692
        %v735 = vmul.f32 %v734, %v692
        %v736 = vmul.f32 %v735, %v734
        %v737 = vmul.f32 0.5, %v736
        %v738 = vsub.f32 1.5, %v737
        %v739 = vmul.f32 %v734, %v738
        %vm740 = vweird.f32 %v692
        %vm741 = vweird.f32 %v734
        %vm742 = vmor %vm740, %vm741
        %v743 = vsel %vm742, %v734, %v739
        %v744 = vrsqrt.pop %v693
        %v745 = vmul.f32 %v744, %v693
        %v746 = vmul.f32 %v745, %v744
        %v747 = vmul.f32 0.5, %v746
        %v748 = vsub.f32 1.5, %v747
        %v749 = vmul.f32 %v744, %v748
        %vm750 = vweird.f32 %v693
        %vm751 = vweird.f32 %v744
        %vm752 = vmor %vm750, %vm751
        %v753 = vsel %vm752, %v744, %v749
        %v754 = vmul.f32 %v634, %v703
        %v755 = vmul.f32 %v635, %v713
        %v756 = vmul.f32 %v636, %v723
        %v757 = vmul.f32 %v637, %v733
        %v758 = vmul.f32 %v638, %v743
        %v759 = vmul.f32 %v639, %v753
        %760 = vset.pattern.permute.xlu0 1
        %761 = vperm.xlu0 %760, %v409
        %v762 = vpop.permute.xlu0 %761
        %v764 = vmul.f32 %v762, %v754
        %v765 = vmul.f32 %v762, %v755
        %v766 = vmul.f32 %v762, %v756
        %v767 = vmul.f32 %v762, %v757
        %v768 = vmul.f32 %v762, %v758
        %v769 = vmul.f32 %v762, %v759
        %770 = vset.pattern.permute.xlu0 2
        %771 = vperm.xlu0 %770, %v409
        %v772 = vpop.permute.xlu0 %771
        %v774 = vadd.f32 %v764, %v772
        %v775 = vadd.f32 %v765, %v772
        %v776 = vadd.f32 %v766, %v772
        %v777 = vadd.f32 %v767, %v772
        %v778 = vadd.f32 %v768, %v772
        %v779 = vadd.f32 %v769, %v772
        %v781 = vperm.slane %v407, 0
        %v782 = vperm.slane %v407, 1
        %v783 = vperm.slane %v407, 2
        %v784 = vperm.slane %v407, 3
        %v785 = vperm.slane %v407, 4
        %v786 = vperm.slane %v407, 5
        %v793 = vmul.f32 %v774, %v781
        %v794 = vmul.f32 %v775, %v782
        %v795 = vmul.f32 %v776, %v783
        %v796 = vmul.f32 %v777, %v784
        %v797 = vmul.f32 %v778, %v785
        %v798 = vmul.f32 %v779, %v786
        %799 = vst [vmem:[#allocation2] sm:$0xff] %v793
        %800 = vst [vmem:[#allocation2 + $0x8] sm:$0xff] %v794
        %801 = vst [vmem:[#allocation2 + $0x10] sm:$0xff] %v795
        %802 = vst [vmem:[#allocation2 + $0x18] sm:$0xff] %v796
        %803 = vst [vmem:[#allocation2 + $0x20] sm:$0xff] %v797
        %804 = vst [vmem:[#allocation2 + $0x28] sm:$0xff] %v798
        %v805 = vpack.c.bf16 %v794, %v793
        %v806 = vpack.c.bf16 %v796, %v795
        %v807 = vpack.c.bf16 %v798, %v797
        %808 = vst [vmem:[%s387] sm:$0xff] %v805
        %809 = vst [vmem:[%s387 + $0x8] sm:$0xff] %v806
        %810 = vst [vmem:[%s387 + $0x10] sm:$0xff] %v807
        %v811 = vld [vmem:[#allocation2] sm:$0xff]
        %v812 = vld [vmem:[#allocation2 + $0x8] sm:$0xff]
        %v813 = vld [vmem:[#allocation2 + $0x10] sm:$0xff]
        %v814 = vld [vmem:[#allocation2 + $0x18] sm:$0xff]
        %v815 = vld [vmem:[#allocation2 + $0x20] sm:$0xff]
        %v816 = vld [vmem:[#allocation9] sm:$0xff]
        %818 = vset.pattern.permute.xlu0 0
        %819 = vperm.xlu0 %818, %v816
        %v820 = vpop.permute.xlu0 %819
        %v822 = vmul.f32 %v811, %v820
        %v823 = vmul.f32 %v812, %v820
        %v824 = vmul.f32 %v813, %v820
        %v825 = vmul.f32 %v814, %v820
        %v826 = vmul.f32 %v815, %v820
        %v827 = vadd.f32 %v822, 0.0
        %v828 = vadd.f32 %v823, 0.0
        %v829 = vadd.f32 %v824, 0.0
        %v830 = vadd.f32 %v825, 0.0
        %v831 = vadd.f32 %v826, 0.0
        %v832 = vld [vmem:[#allocation2] sm:$0xff]
        %v833 = vld [vmem:[#allocation2 + $0x8] sm:$0xff]
        %v834 = vld [vmem:[#allocation2 + $0x10] sm:$0xff]
        %v835 = vld [vmem:[#allocation2 + $0x18] sm:$0xff]
        %v836 = vld [vmem:[#allocation2 + $0x20] sm:$0xff]
        %v837 = vld [vmem:[#allocation2 + $0x28] sm:$0xff]
        %838 = vset.pattern.permute.xlu0 1
        %839 = vperm.xlu0 %838, %v816
        %v840 = vpop.permute.xlu0 %839
        %v842 = vmul.f32 %v832, %v840
        %v843 = vmul.f32 %v833, %v840
        %v844 = vmul.f32 %v834, %v840
        %v845 = vmul.f32 %v835, %v840
        %v846 = vmul.f32 %v836, %v840
        %v847 = vmul.f32 %v837, %v840
        %854 = vrot.lane.b32.xlu0 %v842, 127
        %v855 = vpop.permute.xlu0 %854
        %856 = vrot.lane.b32.xlu0 %v843, 127
        %v857 = vpop.permute.xlu0 %856
        %858 = vrot.lane.b32.xlu0 %v844, 127
        %v859 = vpop.permute.xlu0 %858
        %860 = vrot.lane.b32.xlu0 %v845, 127
        %v861 = vpop.permute.xlu0 %860
        %862 = vrot.lane.b32.xlu0 %v846, 127
        %v863 = vpop.permute.xlu0 %862
        %864 = vrot.lane.b32.xlu0 %v847, 127
        %v865 = vpop.permute.xlu0 %864
        %vm866 = vcmask 1039360
        %v867 = vsel %vm866, %v855, %v857
        %v868 = vsel %vm866, %v857, %v859
        %v869 = vsel %vm866, %v859, %v861
        %v870 = vsel %vm866, %v861, %v863
        %v871 = vsel %vm866, %v863, %v865
        %v877 = vadd.f32 %v827, %v867
        %v878 = vadd.f32 %v828, %v868
        %v879 = vadd.f32 %v829, %v869
        %v880 = vadd.f32 %v830, %v870
        %v881 = vadd.f32 %v831, %v871
        %882 = vset.pattern.permute.xlu0 2
        %883 = vperm.xlu0 %882, %v816
        %v884 = vpop.permute.xlu0 %883
        %v886 = vmul.f32 %v832, %v884
        %v887 = vmul.f32 %v833, %v884
        %v888 = vmul.f32 %v834, %v884
        %v889 = vmul.f32 %v835, %v884
        %v890 = vmul.f32 %v836, %v884
        %v891 = vmul.f32 %v837, %v884
        %898 = vrot.lane.b32.xlu0 %v886, 126
        %v899 = vpop.permute.xlu0 %898
        %900 = vrot.lane.b32.xlu0 %v887, 126
        %v901 = vpop.permute.xlu0 %900
        %902 = vrot.lane.b32.xlu0 %v888, 126
        %v903 = vpop.permute.xlu0 %902
        %904 = vrot.lane.b32.xlu0 %v889, 126
        %v905 = vpop.permute.xlu0 %904
        %906 = vrot.lane.b32.xlu0 %v890, 126
        %v907 = vpop.permute.xlu0 %906
        %908 = vrot.lane.b32.xlu0 %v891, 126
        %v909 = vpop.permute.xlu0 %908
        %vm910 = vcmask 1031168
        %v911 = vsel %vm910, %v899, %v901
        %v912 = vsel %vm910, %v901, %v903
        %v913 = vsel %vm910, %v903, %v905
        %v914 = vsel %vm910, %v905, %v907
        %v915 = vsel %vm910, %v907, %v909
        %v921 = vadd.f32 %v877, %v911
        %v922 = vadd.f32 %v878, %v912
        %v923 = vadd.f32 %v879, %v913
        %v924 = vadd.f32 %v880, %v914
        %v925 = vadd.f32 %v881, %v915
        %926 = vset.pattern.permute.xlu0 3
        %927 = vperm.xlu0 %926, %v816
        %v928 = vpop.permute.xlu0 %927
        %v930 = vmul.f32 %v832, %v928
        %v931 = vmul.f32 %v833, %v928
        %v932 = vmul.f32 %v834, %v928
        %v933 = vmul.f32 %v835, %v928
        %v934 = vmul.f32 %v836, %v928
        %v935 = vmul.f32 %v837, %v928
        %942 = vrot.lane.b32.xlu0 %v930, 125
        %v943 = vpop.permute.xlu0 %942
        %944 = vrot.lane.b32.xlu0 %v931, 125
        %v945 = vpop.permute.xlu0 %944
        %946 = vrot.lane.b32.xlu0 %v932, 125
        %v947 = vpop.permute.xlu0 %946
        %948 = vrot.lane.b32.xlu0 %v933, 125
        %v949 = vpop.permute.xlu0 %948
        %950 = vrot.lane.b32.xlu0 %v934, 125
        %v951 = vpop.permute.xlu0 %950
        %952 = vrot.lane.b32.xlu0 %v935, 125
        %v953 = vpop.permute.xlu0 %952
        %vm954 = vcmask 1022976
        %v955 = vsel %vm954, %v943, %v945
        %v956 = vsel %vm954, %v945, %v947
        %v957 = vsel %vm954, %v947, %v949
        %v958 = vsel %vm954, %v949, %v951
        %v959 = vsel %vm954, %v951, %v953
        %v965 = vadd.f32 %v921, %v955
        %v966 = vadd.f32 %v922, %v956
        %v967 = vadd.f32 %v923, %v957
        %v968 = vadd.f32 %v924, %v958
        %v969 = vadd.f32 %v925, %v959
        %970 = vset.pattern.permute.xlu0 4
        %971 = vperm.xlu0 %970, %v816
        %v972 = vpop.permute.xlu0 %971
        %v974 = vmul.f32 %v832, %v972
        %v975 = vmul.f32 %v833, %v972
        %v976 = vmul.f32 %v834, %v972
        %v977 = vmul.f32 %v835, %v972
        %v978 = vmul.f32 %v836, %v972
        %v979 = vmul.f32 %v837, %v972
        %986 = vrot.lane.b32.xlu0 %v974, 124
        %v987 = vpop.permute.xlu0 %986
        %988 = vrot.lane.b32.xlu0 %v975, 124
        %v989 = vpop.permute.xlu0 %988
        %990 = vrot.lane.b32.xlu0 %v976, 124
        %v991 = vpop.permute.xlu0 %990
        %992 = vrot.lane.b32.xlu0 %v977, 124
        %v993 = vpop.permute.xlu0 %992
        %994 = vrot.lane.b32.xlu0 %v978, 124
        %v995 = vpop.permute.xlu0 %994
        %996 = vrot.lane.b32.xlu0 %v979, 124
        %v997 = vpop.permute.xlu0 %996
        %vm998 = vcmask 1014784
        %v999 = vsel %vm998, %v987, %v989
        %v1000 = vsel %vm998, %v989, %v991
        %v1001 = vsel %vm998, %v991, %v993
        %v1002 = vsel %vm998, %v993, %v995
        %v1003 = vsel %vm998, %v995, %v997
        %v1009 = vadd.f32 %v965, %v999
        %v1010 = vadd.f32 %v966, %v1000
        %v1011 = vadd.f32 %v967, %v1001
        %v1012 = vadd.f32 %v968, %v1002
        %v1013 = vadd.f32 %v969, %v1003
        %1014 = vset.pattern.permute.xlu0 5
        %1015 = vperm.xlu0 %1014, %v816
        %v1016 = vpop.permute.xlu0 %1015
        %v1018 = vmul.f32 %v832, %v1016
        %v1019 = vmul.f32 %v833, %v1016
        %v1020 = vmul.f32 %v834, %v1016
        %v1021 = vmul.f32 %v835, %v1016
        %v1022 = vmul.f32 %v836, %v1016
        %v1023 = vmul.f32 %v837, %v1016
        %1030 = vrot.lane.b32.xlu0 %v1018, 108
        %v1031 = vpop.permute.xlu0 %1030
        %1032 = vrot.lane.b32.xlu0 %v1019, 108
        %v1033 = vpop.permute.xlu0 %1032
        %1034 = vrot.lane.b32.xlu0 %v1020, 108
        %v1035 = vpop.permute.xlu0 %1034
        %1036 = vrot.lane.b32.xlu0 %v1021, 108
        %v1037 = vpop.permute.xlu0 %1036
        %1038 = vrot.lane.b32.xlu0 %v1022, 108
        %v1039 = vpop.permute.xlu0 %1038
        %1040 = vrot.lane.b32.xlu0 %v1023, 108
        %v1041 = vpop.permute.xlu0 %1040
        %vm1042 = vcmask 883712
        %v1043 = vsel %vm1042, %v1031, %v1033
        %v1044 = vsel %vm1042, %v1033, %v1035
        %v1045 = vsel %vm1042, %v1035, %v1037
        %v1046 = vsel %vm1042, %v1037, %v1039
        %v1047 = vsel %vm1042, %v1039, %v1041
        %v1053 = vadd.f32 %v1009, %v1043
        %v1054 = vadd.f32 %v1010, %v1044
        %v1055 = vadd.f32 %v1011, %v1045
        %v1056 = vadd.f32 %v1012, %v1046
        %v1057 = vadd.f32 %v1013, %v1047
        %1058 = vset.pattern.permute.xlu0 6
        %1059 = vperm.xlu0 %1058, %v816
        %v1060 = vpop.permute.xlu0 %1059
        %v1062 = vmul.f32 %v832, %v1060
        %v1063 = vmul.f32 %v833, %v1060
        %v1064 = vmul.f32 %v834, %v1060
        %v1065 = vmul.f32 %v835, %v1060
        %v1066 = vmul.f32 %v836, %v1060
        %v1067 = vmul.f32 %v837, %v1060
        %1074 = vrot.lane.b32.xlu0 %v1062, 107
        %v1075 = vpop.permute.xlu0 %1074
        %1076 = vrot.lane.b32.xlu0 %v1063, 107
        %v1077 = vpop.permute.xlu0 %1076
        %1078 = vrot.lane.b32.xlu0 %v1064, 107
        %v1079 = vpop.permute.xlu0 %1078
        %1080 = vrot.lane.b32.xlu0 %v1065, 107
        %v1081 = vpop.permute.xlu0 %1080
        %1082 = vrot.lane.b32.xlu0 %v1066, 107
        %v1083 = vpop.permute.xlu0 %1082
        %1084 = vrot.lane.b32.xlu0 %v1067, 107
        %v1085 = vpop.permute.xlu0 %1084
        %vm1086 = vcmask 875520
        %v1087 = vsel %vm1086, %v1075, %v1077
        %v1088 = vsel %vm1086, %v1077, %v1079
        %v1089 = vsel %vm1086, %v1079, %v1081
        %v1090 = vsel %vm1086, %v1081, %v1083
        %v1091 = vsel %vm1086, %v1083, %v1085
        %v1097 = vadd.f32 %v1053, %v1087
        %v1098 = vadd.f32 %v1054, %v1088
        %v1099 = vadd.f32 %v1055, %v1089
        %v1100 = vadd.f32 %v1056, %v1090
        %v1101 = vadd.f32 %v1057, %v1091
        %1102 = vset.pattern.permute.xlu0 7
        %1103 = vperm.xlu0 %1102, %v816
        %v1104 = vpop.permute.xlu0 %1103
        %v1106 = vmul.f32 %v832, %v1104
        %v1107 = vmul.f32 %v833, %v1104
        %v1108 = vmul.f32 %v834, %v1104
        %v1109 = vmul.f32 %v835, %v1104
        %v1110 = vmul.f32 %v836, %v1104
        %v1111 = vmul.f32 %v837, %v1104
        %1118 = vrot.lane.b32.xlu0 %v1106, 106
        %v1119 = vpop.permute.xlu0 %1118
        %1120 = vrot.lane.b32.xlu0 %v1107, 106
        %v1121 = vpop.permute.xlu0 %1120
        %1122 = vrot.lane.b32.xlu0 %v1108, 106
        %v1123 = vpop.permute.xlu0 %1122
        %1124 = vrot.lane.b32.xlu0 %v1109, 106
        %v1125 = vpop.permute.xlu0 %1124
        %1126 = vrot.lane.b32.xlu0 %v1110, 106
        %v1127 = vpop.permute.xlu0 %1126
        %1128 = vrot.lane.b32.xlu0 %v1111, 106
        %v1129 = vpop.permute.xlu0 %1128
        %vm1130 = vcmask 867328
        %v1131 = vsel %vm1130, %v1119, %v1121
        %v1132 = vsel %vm1130, %v1121, %v1123
        %v1133 = vsel %vm1130, %v1123, %v1125
        %v1134 = vsel %vm1130, %v1125, %v1127
        %v1135 = vsel %vm1130, %v1127, %v1129
        %v1141 = vadd.f32 %v1097, %v1131
        %v1142 = vadd.f32 %v1098, %v1132
        %v1143 = vadd.f32 %v1099, %v1133
        %v1144 = vadd.f32 %v1100, %v1134
        %v1145 = vadd.f32 %v1101, %v1135
        %1146 = vset.pattern.permute.xlu0 8
        %1147 = vperm.xlu0 %1146, %v816
        %v1148 = vpop.permute.xlu0 %1147
        %v1150 = vmul.f32 %v832, %v1148
        %v1151 = vmul.f32 %v833, %v1148
        %v1152 = vmul.f32 %v834, %v1148
        %v1153 = vmul.f32 %v835, %v1148
        %v1154 = vmul.f32 %v836, %v1148
        %v1155 = vmul.f32 %v837, %v1148
        %1162 = vrot.lane.b32.xlu0 %v1150, 105
        %v1163 = vpop.permute.xlu0 %1162
        %1164 = vrot.lane.b32.xlu0 %v1151, 105
        %v1165 = vpop.permute.xlu0 %1164
        %1166 = vrot.lane.b32.xlu0 %v1152, 105
        %v1167 = vpop.permute.xlu0 %1166
        %1168 = vrot.lane.b32.xlu0 %v1153, 105
        %v1169 = vpop.permute.xlu0 %1168
        %1170 = vrot.lane.b32.xlu0 %v1154, 105
        %v1171 = vpop.permute.xlu0 %1170
        %1172 = vrot.lane.b32.xlu0 %v1155, 105
        %v1173 = vpop.permute.xlu0 %1172
        %vm1174 = vcmask 859136
        %v1175 = vsel %vm1174, %v1163, %v1165
        %v1176 = vsel %vm1174, %v1165, %v1167
        %v1177 = vsel %vm1174, %v1167, %v1169
        %v1178 = vsel %vm1174, %v1169, %v1171
        %v1179 = vsel %vm1174, %v1171, %v1173
        %v1185 = vadd.f32 %v1141, %v1175
        %v1186 = vadd.f32 %v1142, %v1176
        %v1187 = vadd.f32 %v1143, %v1177
        %v1188 = vadd.f32 %v1144, %v1178
        %v1189 = vadd.f32 %v1145, %v1179
        %1190 = vset.pattern.permute.xlu0 9
        %1191 = vperm.xlu0 %1190, %v816
        %v1192 = vpop.permute.xlu0 %1191
        %v1194 = vmul.f32 %v832, %v1192
        %v1195 = vmul.f32 %v833, %v1192
        %v1196 = vmul.f32 %v834, %v1192
        %v1197 = vmul.f32 %v835, %v1192
        %v1198 = vmul.f32 %v836, %v1192
        %v1199 = vmul.f32 %v837, %v1192
        %1206 = vrot.lane.b32.xlu0 %v1194, 104
        %v1207 = vpop.permute.xlu0 %1206
        %1208 = vrot.lane.b32.xlu0 %v1195, 104
        %v1209 = vpop.permute.xlu0 %1208
        %1210 = vrot.lane.b32.xlu0 %v1196, 104
        %v1211 = vpop.permute.xlu0 %1210
        %1212 = vrot.lane.b32.xlu0 %v1197, 104
        %v1213 = vpop.permute.xlu0 %1212
        %1214 = vrot.lane.b32.xlu0 %v1198, 104
        %v1215 = vpop.permute.xlu0 %1214
        %1216 = vrot.lane.b32.xlu0 %v1199, 104
        %v1217 = vpop.permute.xlu0 %1216
        %vm1218 = vcmask 850944
        %v1219 = vsel %vm1218, %v1207, %v1209
        %v1220 = vsel %vm1218, %v1209, %v1211
        %v1221 = vsel %vm1218, %v1211, %v1213
        %v1222 = vsel %vm1218, %v1213, %v1215
        %v1223 = vsel %vm1218, %v1215, %v1217
        %v1229 = vadd.f32 %v1185, %v1219
        %v1230 = vadd.f32 %v1186, %v1220
        %v1231 = vadd.f32 %v1187, %v1221
        %v1232 = vadd.f32 %v1188, %v1222
        %v1233 = vadd.f32 %v1189, %v1223
        %1234 = vset.pattern.permute.xlu0 10
        %1235 = vperm.xlu0 %1234, %v816
        %v1236 = vpop.permute.xlu0 %1235
        %v1238 = vmul.f32 %v832, %v1236
        %v1239 = vmul.f32 %v833, %v1236
        %v1240 = vmul.f32 %v834, %v1236
        %v1241 = vmul.f32 %v835, %v1236
        %v1242 = vmul.f32 %v836, %v1236
        %v1243 = vmul.f32 %v837, %v1236
        %1250 = vrot.lane.b32.xlu0 %v1238, 88
        %v1251 = vpop.permute.xlu0 %1250
        %1252 = vrot.lane.b32.xlu0 %v1239, 88
        %v1253 = vpop.permute.xlu0 %1252
        %1254 = vrot.lane.b32.xlu0 %v1240, 88
        %v1255 = vpop.permute.xlu0 %1254
        %1256 = vrot.lane.b32.xlu0 %v1241, 88
        %v1257 = vpop.permute.xlu0 %1256
        %1258 = vrot.lane.b32.xlu0 %v1242, 88
        %v1259 = vpop.permute.xlu0 %1258
        %1260 = vrot.lane.b32.xlu0 %v1243, 88
        %v1261 = vpop.permute.xlu0 %1260
        %vm1262 = vcmask 719872
        %v1263 = vsel %vm1262, %v1251, %v1253
        %v1264 = vsel %vm1262, %v1253, %v1255
        %v1265 = vsel %vm1262, %v1255, %v1257
        %v1266 = vsel %vm1262, %v1257, %v1259
        %v1267 = vsel %vm1262, %v1259, %v1261
        %v1273 = vadd.f32 %v1229, %v1263
        %v1274 = vadd.f32 %v1230, %v1264
        %v1275 = vadd.f32 %v1231, %v1265
        %v1276 = vadd.f32 %v1232, %v1266
        %v1277 = vadd.f32 %v1233, %v1267
        %1278 = vset.pattern.permute.xlu0 11
        %1279 = vperm.xlu0 %1278, %v816
        %v1280 = vpop.permute.xlu0 %1279
        %v1282 = vmul.f32 %v832, %v1280
        %v1283 = vmul.f32 %v833, %v1280
        %v1284 = vmul.f32 %v834, %v1280
        %v1285 = vmul.f32 %v835, %v1280
        %v1286 = vmul.f32 %v836, %v1280
        %v1287 = vmul.f32 %v837, %v1280
        %1294 = vrot.lane.b32.xlu0 %v1282, 87
        %v1295 = vpop.permute.xlu0 %1294
        %1296 = vrot.lane.b32.xlu0 %v1283, 87
        %v1297 = vpop.permute.xlu0 %1296
        %1298 = vrot.lane.b32.xlu0 %v1284, 87
        %v1299 = vpop.permute.xlu0 %1298
        %1300 = vrot.lane.b32.xlu0 %v1285, 87
        %v1301 = vpop.permute.xlu0 %1300
        %1302 = vrot.lane.b32.xlu0 %v1286, 87
        %v1303 = vpop.permute.xlu0 %1302
        %1304 = vrot.lane.b32.xlu0 %v1287, 87
        %v1305 = vpop.permute.xlu0 %1304
        %vm1306 = vcmask 711680
        %v1307 = vsel %vm1306, %v1295, %v1297
        %v1308 = vsel %vm1306, %v1297, %v1299
        %v1309 = vsel %vm1306, %v1299, %v1301
        %v1310 = vsel %vm1306, %v1301, %v1303
        %v1311 = vsel %vm1306, %v1303, %v1305
        %v1317 = vadd.f32 %v1273, %v1307
        %v1318 = vadd.f32 %v1274, %v1308
        %v1319 = vadd.f32 %v1275, %v1309
        %v1320 = vadd.f32 %v1276, %v1310
        %v1321 = vadd.f32 %v1277, %v1311
        %1322 = vset.pattern.permute.xlu0 12
        %1323 = vperm.xlu0 %1322, %v816
        %v1324 = vpop.permute.xlu0 %1323
        %v1326 = vmul.f32 %v832, %v1324
        %v1327 = vmul.f32 %v833, %v1324
        %v1328 = vmul.f32 %v834, %v1324
        %v1329 = vmul.f32 %v835, %v1324
        %v1330 = vmul.f32 %v836, %v1324
        %v1331 = vmul.f32 %v837, %v1324
        %1338 = vrot.lane.b32.xlu0 %v1326, 86
        %v1339 = vpop.permute.xlu0 %1338
        %1340 = vrot.lane.b32.xlu0 %v1327, 86
        %v1341 = vpop.permute.xlu0 %1340
        %1342 = vrot.lane.b32.xlu0 %v1328, 86
        %v1343 = vpop.permute.xlu0 %1342
        %1344 = vrot.lane.b32.xlu0 %v1329, 86
        %v1345 = vpop.permute.xlu0 %1344
        %1346 = vrot.lane.b32.xlu0 %v1330, 86
        %v1347 = vpop.permute.xlu0 %1346
        %1348 = vrot.lane.b32.xlu0 %v1331, 86
        %v1349 = vpop.permute.xlu0 %1348
        %vm1350 = vcmask 703488
        %v1351 = vsel %vm1350, %v1339, %v1341
        %v1352 = vsel %vm1350, %v1341, %v1343
        %v1353 = vsel %vm1350, %v1343, %v1345
        %v1354 = vsel %vm1350, %v1345, %v1347
        %v1355 = vsel %vm1350, %v1347, %v1349
        %v1361 = vadd.f32 %v1317, %v1351
        %v1362 = vadd.f32 %v1318, %v1352
        %v1363 = vadd.f32 %v1319, %v1353
        %v1364 = vadd.f32 %v1320, %v1354
        %v1365 = vadd.f32 %v1321, %v1355
        %1366 = vset.pattern.permute.xlu0 13
        %1367 = vperm.xlu0 %1366, %v816
        %v1368 = vpop.permute.xlu0 %1367
        %v1370 = vmul.f32 %v832, %v1368
        %v1371 = vmul.f32 %v833, %v1368
        %v1372 = vmul.f32 %v834, %v1368
        %v1373 = vmul.f32 %v835, %v1368
        %v1374 = vmul.f32 %v836, %v1368
        %v1375 = vmul.f32 %v837, %v1368
        %1382 = vrot.lane.b32.xlu0 %v1370, 85
        %v1383 = vpop.permute.xlu0 %1382
        %1384 = vrot.lane.b32.xlu0 %v1371, 85
        %v1385 = vpop.permute.xlu0 %1384
        %1386 = vrot.lane.b32.xlu0 %v1372, 85
        %v1387 = vpop.permute.xlu0 %1386
        %1388 = vrot.lane.b32.xlu0 %v1373, 85
        %v1389 = vpop.permute.xlu0 %1388
        %1390 = vrot.lane.b32.xlu0 %v1374, 85
        %v1391 = vpop.permute.xlu0 %1390
        %1392 = vrot.lane.b32.xlu0 %v1375, 85
        %v1393 = vpop.permute.xlu0 %1392
        %vm1394 = vcmask 695296
        %v1395 = vsel %vm1394, %v1383, %v1385
        %v1396 = vsel %vm1394, %v1385, %v1387
        %v1397 = vsel %vm1394, %v1387, %v1389
        %v1398 = vsel %vm1394, %v1389, %v1391
        %v1399 = vsel %vm1394, %v1391, %v1393
        %v1405 = vadd.f32 %v1361, %v1395
        %v1406 = vadd.f32 %v1362, %v1396
        %v1407 = vadd.f32 %v1363, %v1397
        %v1408 = vadd.f32 %v1364, %v1398
        %v1409 = vadd.f32 %v1365, %v1399
        %1410 = vset.pattern.permute.xlu0 14
        %1411 = vperm.xlu0 %1410, %v816
        %v1412 = vpop.permute.xlu0 %1411
        %v1414 = vmul.f32 %v832, %v1412
        %v1415 = vmul.f32 %v833, %v1412
        %v1416 = vmul.f32 %v834, %v1412
        %v1417 = vmul.f32 %v835, %v1412
        %v1418 = vmul.f32 %v836, %v1412
        %v1419 = vmul.f32 %v837, %v1412
        %1426 = vrot.lane.b32.xlu0 %v1414, 84
        %v1427 = vpop.permute.xlu0 %1426
        %1428 = vrot.lane.b32.xlu0 %v1415, 84
        %v1429 = vpop.permute.xlu0 %1428
        %1430 = vrot.lane.b32.xlu0 %v1416, 84
        %v1431 = vpop.permute.xlu0 %1430
        %1432 = vrot.lane.b32.xlu0 %v1417, 84
        %v1433 = vpop.permute.xlu0 %1432
        %1434 = vrot.lane.b32.xlu0 %v1418, 84
        %v1435 = vpop.permute.xlu0 %1434
        %1436 = vrot.lane.b32.xlu0 %v1419, 84
        %v1437 = vpop.permute.xlu0 %1436
        %vm1438 = vcmask 687104
        %v1439 = vsel %vm1438, %v1427, %v1429
        %v1440 = vsel %vm1438, %v1429, %v1431
        %v1441 = vsel %vm1438, %v1431, %v1433
        %v1442 = vsel %vm1438, %v1433, %v1435
        %v1443 = vsel %vm1438, %v1435, %v1437
        %v1449 = vadd.f32 %v1405, %v1439
        %v1450 = vadd.f32 %v1406, %v1440
        %v1451 = vadd.f32 %v1407, %v1441
        %v1452 = vadd.f32 %v1408, %v1442
        %v1453 = vadd.f32 %v1409, %v1443
        %1454 = vset.pattern.permute.xlu0 15
        %1455 = vperm.xlu0 %1454, %v816
        %v1456 = vpop.permute.xlu0 %1455
        %v1458 = vmul.f32 %v832, %v1456
        %v1459 = vmul.f32 %v833, %v1456
        %v1460 = vmul.f32 %v834, %v1456
        %v1461 = vmul.f32 %v835, %v1456
        %v1462 = vmul.f32 %v836, %v1456
        %v1463 = vmul.f32 %v837, %v1456
        %1470 = vrot.lane.b32.xlu0 %v1458, 68
        %v1471 = vpop.permute.xlu0 %1470
        %1472 = vrot.lane.b32.xlu0 %v1459, 68
        %v1473 = vpop.permute.xlu0 %1472
        %1474 = vrot.lane.b32.xlu0 %v1460, 68
        %v1475 = vpop.permute.xlu0 %1474
        %1476 = vrot.lane.b32.xlu0 %v1461, 68
        %v1477 = vpop.permute.xlu0 %1476
        %1478 = vrot.lane.b32.xlu0 %v1462, 68
        %v1479 = vpop.permute.xlu0 %1478
        %1480 = vrot.lane.b32.xlu0 %v1463, 68
        %v1481 = vpop.permute.xlu0 %1480
        %vm1482 = vcmask 556032
        %v1483 = vsel %vm1482, %v1471, %v1473
        %v1484 = vsel %vm1482, %v1473, %v1475
        %v1485 = vsel %vm1482, %v1475, %v1477
        %v1486 = vsel %vm1482, %v1477, %v1479
        %v1487 = vsel %vm1482, %v1479, %v1481
        %v1493 = vadd.f32 %v1449, %v1483
        %v1494 = vadd.f32 %v1450, %v1484
        %v1495 = vadd.f32 %v1451, %v1485
        %v1496 = vadd.f32 %v1452, %v1486
        %v1497 = vadd.f32 %v1453, %v1487
        %1498 = vset.pattern.permute.xlu0 16
        %1499 = vperm.xlu0 %1498, %v816
        %v1500 = vpop.permute.xlu0 %1499
        %v1502 = vmul.f32 %v832, %v1500
        %v1503 = vmul.f32 %v833, %v1500
        %v1504 = vmul.f32 %v834, %v1500
        %v1505 = vmul.f32 %v835, %v1500
        %v1506 = vmul.f32 %v836, %v1500
        %v1507 = vmul.f32 %v837, %v1500
        %1514 = vrot.lane.b32.xlu0 %v1502, 67
        %v1515 = vpop.permute.xlu0 %1514
        %1516 = vrot.lane.b32.xlu0 %v1503, 67
        %v1517 = vpop.permute.xlu0 %1516
        %1518 = vrot.lane.b32.xlu0 %v1504, 67
        %v1519 = vpop.permute.xlu0 %1518
        %1520 = vrot.lane.b32.xlu0 %v1505, 67
        %v1521 = vpop.permute.xlu0 %1520
        %1522 = vrot.lane.b32.xlu0 %v1506, 67
        %v1523 = vpop.permute.xlu0 %1522
        %1524 = vrot.lane.b32.xlu0 %v1507, 67
        %v1525 = vpop.permute.xlu0 %1524
        %vm1526 = vcmask 547840
        %v1527 = vsel %vm1526, %v1515, %v1517
        %v1528 = vsel %vm1526, %v1517, %v1519
        %v1529 = vsel %vm1526, %v1519, %v1521
        %v1530 = vsel %vm1526, %v1521, %v1523
        %v1531 = vsel %vm1526, %v1523, %v1525
        %v1537 = vadd.f32 %v1493, %v1527
        %v1538 = vadd.f32 %v1494, %v1528
        %v1539 = vadd.f32 %v1495, %v1529
        %v1540 = vadd.f32 %v1496, %v1530
        %v1541 = vadd.f32 %v1497, %v1531
        %1542 = vset.pattern.permute.xlu0 17
        %1543 = vperm.xlu0 %1542, %v816
        %v1544 = vpop.permute.xlu0 %1543
        %v1546 = vmul.f32 %v832, %v1544
        %v1547 = vmul.f32 %v833, %v1544
        %v1548 = vmul.f32 %v834, %v1544
        %v1549 = vmul.f32 %v835, %v1544
        %v1550 = vmul.f32 %v836, %v1544
        %v1551 = vmul.f32 %v837, %v1544
        %1558 = vrot.lane.b32.xlu0 %v1546, 66
        %v1559 = vpop.permute.xlu0 %1558
        %1560 = vrot.lane.b32.xlu0 %v1547, 66
        %v1561 = vpop.permute.xlu0 %1560
        %1562 = vrot.lane.b32.xlu0 %v1548, 66
        %v1563 = vpop.permute.xlu0 %1562
        %1564 = vrot.lane.b32.xlu0 %v1549, 66
        %v1565 = vpop.permute.xlu0 %1564
        %1566 = vrot.lane.b32.xlu0 %v1550, 66
        %v1567 = vpop.permute.xlu0 %1566
        %1568 = vrot.lane.b32.xlu0 %v1551, 66
        %v1569 = vpop.permute.xlu0 %1568
        %vm1570 = vcmask 539648
        %v1571 = vsel %vm1570, %v1559, %v1561
        %v1572 = vsel %vm1570, %v1561, %v1563
        %v1573 = vsel %vm1570, %v1563, %v1565
        %v1574 = vsel %vm1570, %v1565, %v1567
        %v1575 = vsel %vm1570, %v1567, %v1569
        %v1581 = vadd.f32 %v1537, %v1571
        %v1582 = vadd.f32 %v1538, %v1572
        %v1583 = vadd.f32 %v1539, %v1573
        %v1584 = vadd.f32 %v1540, %v1574
        %v1585 = vadd.f32 %v1541, %v1575
        %1586 = vset.pattern.permute.xlu0 18
        %1587 = vperm.xlu0 %1586, %v816
        %v1588 = vpop.permute.xlu0 %1587
        %v1590 = vmul.f32 %v832, %v1588
        %v1591 = vmul.f32 %v833, %v1588
        %v1592 = vmul.f32 %v834, %v1588
        %v1593 = vmul.f32 %v835, %v1588
        %v1594 = vmul.f32 %v836, %v1588
        %v1595 = vmul.f32 %v837, %v1588
        %1602 = vrot.lane.b32.xlu0 %v1590, 65
        %v1603 = vpop.permute.xlu0 %1602
        %1604 = vrot.lane.b32.xlu0 %v1591, 65
        %v1605 = vpop.permute.xlu0 %1604
        %1606 = vrot.lane.b32.xlu0 %v1592, 65
        %v1607 = vpop.permute.xlu0 %1606
        %1608 = vrot.lane.b32.xlu0 %v1593, 65
        %v1609 = vpop.permute.xlu0 %1608
        %1610 = vrot.lane.b32.xlu0 %v1594, 65
        %v1611 = vpop.permute.xlu0 %1610
        %1612 = vrot.lane.b32.xlu0 %v1595, 65
        %v1613 = vpop.permute.xlu0 %1612
        %vm1614 = vcmask 531456
        %v1615 = vsel %vm1614, %v1603, %v1605
        %v1616 = vsel %vm1614, %v1605, %v1607
        %v1617 = vsel %vm1614, %v1607, %v1609
        %v1618 = vsel %vm1614, %v1609, %v1611
        %v1619 = vsel %vm1614, %v1611, %v1613
        %v1625 = vadd.f32 %v1581, %v1615
        %v1626 = vadd.f32 %v1582, %v1616
        %v1627 = vadd.f32 %v1583, %v1617
        %v1628 = vadd.f32 %v1584, %v1618
        %v1629 = vadd.f32 %v1585, %v1619
        %1630 = vset.pattern.permute.xlu0 19
        %1631 = vperm.xlu0 %1630, %v816
        %v1632 = vpop.permute.xlu0 %1631
        %v1634 = vmul.f32 %v832, %v1632
        %v1635 = vmul.f32 %v833, %v1632
        %v1636 = vmul.f32 %v834, %v1632
        %v1637 = vmul.f32 %v835, %v1632
        %v1638 = vmul.f32 %v836, %v1632
        %v1639 = vmul.f32 %v837, %v1632
        %1646 = vrot.lane.b32.xlu0 %v1634, 64
        %v1647 = vpop.permute.xlu0 %1646
        %1648 = vrot.lane.b32.xlu0 %v1635, 64
        %v1649 = vpop.permute.xlu0 %1648
        %1650 = vrot.lane.b32.xlu0 %v1636, 64
        %v1651 = vpop.permute.xlu0 %1650
        %1652 = vrot.lane.b32.xlu0 %v1637, 64
        %v1653 = vpop.permute.xlu0 %1652
        %1654 = vrot.lane.b32.xlu0 %v1638, 64
        %v1655 = vpop.permute.xlu0 %1654
        %1656 = vrot.lane.b32.xlu0 %v1639, 64
        %v1657 = vpop.permute.xlu0 %1656
        %vm1658 = vcmask 523264
        %v1659 = vsel %vm1658, %v1647, %v1649
        %v1660 = vsel %vm1658, %v1649, %v1651
        %v1661 = vsel %vm1658, %v1651, %v1653
        %v1662 = vsel %vm1658, %v1653, %v1655
        %v1663 = vsel %vm1658, %v1655, %v1657
        %v1669 = vadd.f32 %v1625, %v1659
        %v1670 = vadd.f32 %v1626, %v1660
        %v1671 = vadd.f32 %v1627, %v1661
        %v1672 = vadd.f32 %v1628, %v1662
        %v1673 = vadd.f32 %v1629, %v1663
        %1674 = vset.pattern.permute.xlu0 20
        %1675 = vperm.xlu0 %1674, %v816
        %v1676 = vpop.permute.xlu0 %1675
        %v1678 = vmul.f32 %v832, %v1676
        %v1679 = vmul.f32 %v833, %v1676
        %v1680 = vmul.f32 %v834, %v1676
        %v1681 = vmul.f32 %v835, %v1676
        %v1682 = vmul.f32 %v836, %v1676
        %v1683 = vmul.f32 %v837, %v1676
        %1690 = vrot.lane.b32.xlu0 %v1678, 48
        %v1691 = vpop.permute.xlu0 %1690
        %1692 = vrot.lane.b32.xlu0 %v1679, 48
        %v1693 = vpop.permute.xlu0 %1692
        %1694 = vrot.lane.b32.xlu0 %v1680, 48
        %v1695 = vpop.permute.xlu0 %1694
        %1696 = vrot.lane.b32.xlu0 %v1681, 48
        %v1697 = vpop.permute.xlu0 %1696
        %1698 = vrot.lane.b32.xlu0 %v1682, 48
        %v1699 = vpop.permute.xlu0 %1698
        %1700 = vrot.lane.b32.xlu0 %v1683, 48
        %v1701 = vpop.permute.xlu0 %1700
        %vm1702 = vcmask 392192
        %v1703 = vsel %vm1702, %v1691, %v1693
        %v1704 = vsel %vm1702, %v1693, %v1695
        %v1705 = vsel %vm1702, %v1695, %v1697
        %v1706 = vsel %vm1702, %v1697, %v1699
        %v1707 = vsel %vm1702, %v1699, %v1701
        %v1713 = vadd.f32 %v1669, %v1703
        %v1714 = vadd.f32 %v1670, %v1704
        %v1715 = vadd.f32 %v1671, %v1705
        %v1716 = vadd.f32 %v1672, %v1706
        %v1717 = vadd.f32 %v1673, %v1707
        %1718 = vset.pattern.permute.xlu0 21
        %1719 = vperm.xlu0 %1718, %v816
        %v1720 = vpop.permute.xlu0 %1719
        %v1722 = vmul.f32 %v832, %v1720
        %v1723 = vmul.f32 %v833, %v1720
        %v1724 = vmul.f32 %v834, %v1720
        %v1725 = vmul.f32 %v835, %v1720
        %v1726 = vmul.f32 %v836, %v1720
        %v1727 = vmul.f32 %v837, %v1720
        %1734 = vrot.lane.b32.xlu0 %v1722, 47
        %v1735 = vpop.permute.xlu0 %1734
        %1736 = vrot.lane.b32.xlu0 %v1723, 47
        %v1737 = vpop.permute.xlu0 %1736
        %1738 = vrot.lane.b32.xlu0 %v1724, 47
        %v1739 = vpop.permute.xlu0 %1738
        %1740 = vrot.lane.b32.xlu0 %v1725, 47
        %v1741 = vpop.permute.xlu0 %1740
        %1742 = vrot.lane.b32.xlu0 %v1726, 47
        %v1743 = vpop.permute.xlu0 %1742
        %1744 = vrot.lane.b32.xlu0 %v1727, 47
        %v1745 = vpop.permute.xlu0 %1744
        %vm1746 = vcmask 384000
        %v1747 = vsel %vm1746, %v1735, %v1737
        %v1748 = vsel %vm1746, %v1737, %v1739
        %v1749 = vsel %vm1746, %v1739, %v1741
        %v1750 = vsel %vm1746, %v1741, %v1743
        %v1751 = vsel %vm1746, %v1743, %v1745
        %v1757 = vadd.f32 %v1713, %v1747
        %v1758 = vadd.f32 %v1714, %v1748
        %v1759 = vadd.f32 %v1715, %v1749
        %v1760 = vadd.f32 %v1716, %v1750
        %v1761 = vadd.f32 %v1717, %v1751
        %1762 = vset.pattern.permute.xlu0 22
        %1763 = vperm.xlu0 %1762, %v816
        %v1764 = vpop.permute.xlu0 %1763
        %v1766 = vmul.f32 %v832, %v1764
        %v1767 = vmul.f32 %v833, %v1764
        %v1768 = vmul.f32 %v834, %v1764
        %v1769 = vmul.f32 %v835, %v1764
        %v1770 = vmul.f32 %v836, %v1764
        %v1771 = vmul.f32 %v837, %v1764
        %1778 = vrot.lane.b32.xlu0 %v1766, 46
        %v1779 = vpop.permute.xlu0 %1778
        %1780 = vrot.lane.b32.xlu0 %v1767, 46
        %v1781 = vpop.permute.xlu0 %1780
        %1782 = vrot.lane.b32.xlu0 %v1768, 46
        %v1783 = vpop.permute.xlu0 %1782
        %1784 = vrot.lane.b32.xlu0 %v1769, 46
        %v1785 = vpop.permute.xlu0 %1784
        %1786 = vrot.lane.b32.xlu0 %v1770, 46
        %v1787 = vpop.permute.xlu0 %1786
        %1788 = vrot.lane.b32.xlu0 %v1771, 46
        %v1789 = vpop.permute.xlu0 %1788
        %vm1790 = vcmask 375808
        %v1791 = vsel %vm1790, %v1779, %v1781
        %v1792 = vsel %vm1790, %v1781, %v1783
        %v1793 = vsel %vm1790, %v1783, %v1785
        %v1794 = vsel %vm1790, %v1785, %v1787
        %v1795 = vsel %vm1790, %v1787, %v1789
        %v1801 = vadd.f32 %v1757, %v1791
        %v1802 = vadd.f32 %v1758, %v1792
        %v1803 = vadd.f32 %v1759, %v1793
        %v1804 = vadd.f32 %v1760, %v1794
        %v1805 = vadd.f32 %v1761, %v1795
        %1806 = vset.pattern.permute.xlu0 23
        %1807 = vperm.xlu0 %1806, %v816
        %v1808 = vpop.permute.xlu0 %1807
        %v1810 = vmul.f32 %v832, %v1808
        %v1811 = vmul.f32 %v833, %v1808
        %v1812 = vmul.f32 %v834, %v1808
        %v1813 = vmul.f32 %v835, %v1808
        %v1814 = vmul.f32 %v836, %v1808
        %v1815 = vmul.f32 %v837, %v1808
        %1822 = vrot.lane.b32.xlu0 %v1810, 45
        %v1823 = vpop.permute.xlu0 %1822
        %1824 = vrot.lane.b32.xlu0 %v1811, 45
        %v1825 = vpop.permute.xlu0 %1824
        %1826 = vrot.lane.b32.xlu0 %v1812, 45
        %v1827 = vpop.permute.xlu0 %1826
        %1828 = vrot.lane.b32.xlu0 %v1813, 45
        %v1829 = vpop.permute.xlu0 %1828
        %1830 = vrot.lane.b32.xlu0 %v1814, 45
        %v1831 = vpop.permute.xlu0 %1830
        %1832 = vrot.lane.b32.xlu0 %v1815, 45
        %v1833 = vpop.permute.xlu0 %1832
        %vm1834 = vcmask 367616
        %v1835 = vsel %vm1834, %v1823, %v1825
        %v1836 = vsel %vm1834, %v1825, %v1827
        %v1837 = vsel %vm1834, %v1827, %v1829
        %v1838 = vsel %vm1834, %v1829, %v1831
        %v1839 = vsel %vm1834, %v1831, %v1833
        %v1845 = vadd.f32 %v1801, %v1835
        %v1846 = vadd.f32 %v1802, %v1836
        %v1847 = vadd.f32 %v1803, %v1837
        %v1848 = vadd.f32 %v1804, %v1838
        %v1849 = vadd.f32 %v1805, %v1839
        %1850 = vset.pattern.permute.xlu0 24
        %1851 = vperm.xlu0 %1850, %v816
        %v1852 = vpop.permute.xlu0 %1851
        %v1854 = vmul.f32 %v832, %v1852
        %v1855 = vmul.f32 %v833, %v1852
        %v1856 = vmul.f32 %v834, %v1852
        %v1857 = vmul.f32 %v835, %v1852
        %v1858 = vmul.f32 %v836, %v1852
        %v1859 = vmul.f32 %v837, %v1852
        %1866 = vrot.lane.b32.xlu0 %v1854, 44
        %v1867 = vpop.permute.xlu0 %1866
        %1868 = vrot.lane.b32.xlu0 %v1855, 44
        %v1869 = vpop.permute.xlu0 %1868
        %1870 = vrot.lane.b32.xlu0 %v1856, 44
        %v1871 = vpop.permute.xlu0 %1870
        %1872 = vrot.lane.b32.xlu0 %v1857, 44
        %v1873 = vpop.permute.xlu0 %1872
        %1874 = vrot.lane.b32.xlu0 %v1858, 44
        %v1875 = vpop.permute.xlu0 %1874
        %1876 = vrot.lane.b32.xlu0 %v1859, 44
        %v1877 = vpop.permute.xlu0 %1876
        %vm1878 = vcmask 359424
        %v1879 = vsel %vm1878, %v1867, %v1869
        %v1880 = vsel %vm1878, %v1869, %v1871
        %v1881 = vsel %vm1878, %v1871, %v1873
        %v1882 = vsel %vm1878, %v1873, %v1875
        %v1883 = vsel %vm1878, %v1875, %v1877
        %v1889 = vadd.f32 %v1845, %v1879
        %v1890 = vadd.f32 %v1846, %v1880
        %v1891 = vadd.f32 %v1847, %v1881
        %v1892 = vadd.f32 %v1848, %v1882
        %v1893 = vadd.f32 %v1849, %v1883
        %v1894 = vmul.f32 %v1889, 0.5
        %v1895 = vmul.f32 %v1890, 0.5
        %v1896 = vmul.f32 %v1891, 0.5
        %v1897 = vmul.f32 %v1892, 0.5
        %v1898 = vmul.f32 %v1893, 0.5
        %v1899 = vmul.f32 %v1889, 0.044715
        %v1900 = vmul.f32 %v1890, 0.044715
        %v1901 = vmul.f32 %v1891, 0.044715
        %v1902 = vmul.f32 %v1892, 0.044715
        %v1903 = vmul.f32 %v1893, 0.044715
        %v1904 = vmul.f32 %v1899, %v1889
        %v1905 = vmul.f32 %v1900, %v1890
        %v1906 = vmul.f32 %v1901, %v1891
        %v1907 = vmul.f32 %v1902, %v1892
        %v1908 = vmul.f32 %v1903, %v1893
        %v1909 = vmul.f32 %v1904, %v1889
        %v1910 = vmul.f32 %v1905, %v1890
        %v1911 = vmul.f32 %v1906, %v1891
        %v1912 = vmul.f32 %v1907, %v1892
        %v1913 = vmul.f32 %v1908, %v1893
        %v1914 = vadd.f32 %v1889, %v1909
        %v1915 = vadd.f32 %v1890, %v1910
        %v1916 = vadd.f32 %v1891, %v1911
        %v1917 = vadd.f32 %v1892, %v1912
        %v1918 = vadd.f32 %v1893, %v1913
        %v1919 = vmul.f32 %v1914, 0.7978846
        %v1920 = vmul.f32 %v1915, 0.7978846
        %v1921 = vmul.f32 %v1916, 0.7978846
        %v1922 = vmul.f32 %v1917, 0.7978846
        %v1923 = vmul.f32 %v1918, 0.7978846
        %v1924 = vtanh.pop %v1919
        %v1925 = vtanh.pop %v1920
        %v1926 = vtanh.pop %v1921
        %v1927 = vtanh.pop %v1922
        %v1928 = vtanh.pop %v1923
        %v1929 = vadd.f32 %v1924, 1.0
        %v1930 = vadd.f32 %v1925, 1.0
        %v1931 = vadd.f32 %v1926, 1.0
        %v1932 = vadd.f32 %v1927, 1.0
        %v1933 = vadd.f32 %v1928, 1.0
        %v1934 = vmul.f32 %v1894, %v1929
        %v1935 = vmul.f32 %v1895, %v1930
        %v1936 = vmul.f32 %v1896, %v1931
        %v1937 = vmul.f32 %v1897, %v1932
        %v1938 = vmul.f32 %v1898, %v1933
        %1939 = vst [vmem:[%s394] sm:$0xff] %v1934
        %1940 = vst [vmem:[%s394 + $0x8] sm:$0xff] %v1935
        %1941 = vst [vmem:[%s394 + $0x10] sm:$0xff] %v1936
        %1942 = vst [vmem:[%s394 + $0x18] sm:$0xff] %v1937
        %1943 = vst [vmem:[%s394 + $0x20] sm:$0xff] %v1938
        %1944 = vrot.lane.b32.xlu0 %v781, 86
        %v1945 = vpop.permute.xlu0 %1944
        %1946 = vrot.lane.b32.xlu0 %v782, 86
        %v1947 = vpop.permute.xlu0 %1946
        %1948 = vrot.lane.b32.xlu0 %v783, 86
        %v1949 = vpop.permute.xlu0 %1948
        %1950 = vrot.lane.b32.xlu0 %v784, 86
        %v1951 = vpop.permute.xlu0 %1950
        %1952 = vrot.lane.b32.xlu0 %v785, 86
        %v1953 = vpop.permute.xlu0 %1952
        %1954 = vrot.lane.b32.xlu0 %v786, 86
        %v1955 = vpop.permute.xlu0 %1954
        %v1956 = vsel %vm1350, %v1945, %v1947
        %v1957 = vsel %vm1350, %v1947, %v1949
        %v1958 = vsel %vm1350, %v1949, %v1951
        %v1959 = vsel %vm1350, %v1951, %v1953
        %v1960 = vsel %vm1350, %v1953, %v1955
        %v1966 = vmul.f32 %v1934, %v1956
        %v1967 = vmul.f32 %v1935, %v1957
        %v1968 = vmul.f32 %v1936, %v1958
        %v1969 = vmul.f32 %v1937, %v1959
        %v1970 = vmul.f32 %v1938, %v1960
        %v1971 = vadd.f32 %v1966, %v1967
        %v1972 = vadd.f32 %v1971, %v1968
        %v1973 = vadd.f32 %v1972, %v1969
        %v1974 = vadd.f32 %v1973, %v1970
        %1975 = vadd.xlane.f32.xlu0 %v1974
        %v1976 = vpop.xlane.xlu0 %1975
        %v1977 = vadd.f32 %v1976, 0.0
        %1978 = vst [vmem:[%s401] sm:$0xff] %v1977
        %s1979 = sand.u32 %s169, 1
        %s1980 = scalar_lea.sflag [#allocation5], %s1979
        %s1981 = sand.u32 %s169, 1
        %s1982 = smul.addr %s1981, 24
        %s1983 = scalar_lea.vmem [#allocation12], %s1982
        %s1984 = sand.u32 %s30, 1
        %s1985 = scalar_lea.sflag [#allocation14], %s1984
        %s1986 = sand.u32 %s197, 1
        %s1987 = smul.addr %s1986, 40
        %s1988 = scalar_lea.vmem [#allocation13], %s1987
        %s1989 = sand.u32 %s30, 1
        %s1990 = scalar_lea.sflag [#allocation14], %s1989
        %s1991 = sand.u32 %s225, 1
        %s1992 = smul.addr %s1991, 8
        %s1993 = scalar_lea.vmem [#allocation15], %s1992
        // Predicated region
        $region61: #{tpu_custom_call.1} parent=39 // pred_check
          %p1994 = pneg %p179
        $region62: #{tpu_custom_call.1} parent=39 // pred_check_branch
          %1996 = sbr.rel (%p1994) target = $region64
        $region63: #{tpu_custom_call.1} parent=39 // pred_region
          %1998 = vsyncadd %s1980, 0
          %s1999 = smul.addr %s35, 6
          %s2000 = smul.addr %s34, 6
          %s2001 = sadd.s32 %s1999, %s2000
          %s2002 = smul.addr %s2001, 4
          %s2003 = scalar_lea.hbm %s5, %s2002
          %s2005 = sshll.u32 %s1983, 4
          %s2006 = int_to_ptr.vmem [resolvable:$true] %s2005
          %s2007 = sshll.u32 %s2003, 4
          %s2008 = int_to_ptr.hbm [resolvable:$true] %s2007
          %2010 = dma.vmem_to_hbm [thread:$0]  %s2006, 384, %s2008, %s1980
        $region64: #{tpu_custom_call.1} parent=39 // pred_fallthru
          _
        // Predicated region
        $region65: #{tpu_custom_call.1} parent=39 // pred_check
          %p2011 = pneg %p207
        $region66: #{tpu_custom_call.1} parent=39 // pred_check_branch
          %2013 = sbr.rel (%p2011) target = $region68
        $region67: #{tpu_custom_call.1} parent=39 // pred_region
          %s2014 = smul.u32 5, %s35
          %2016 = vsyncadd %s1985, 0
          %s2017 = smul.addr %s34, 5
          %s2018 = sadd.s32 %s2014, %s2017
          %s2019 = smul.addr %s2018, 8
          %s2020 = scalar_lea.hbm %s6, %s2019
          %s2022 = sshll.u32 %s1988, 4
          %s2023 = int_to_ptr.vmem [resolvable:$true] %s2022
          %s2024 = sshll.u32 %s2020, 4
          %s2025 = int_to_ptr.hbm [resolvable:$true] %s2024
          %2027 = dma.vmem_to_hbm [thread:$0]  %s2023, 640, %s2025, %s1985
        $region68: #{tpu_custom_call.1} parent=39 // pred_fallthru
          _
        // Predicated region
        $region69: #{tpu_custom_call.1} parent=39 // pred_check
          %p2028 = pneg %p235
        $region70: #{tpu_custom_call.1} parent=39 // pred_check_branch
          %2030 = sbr.rel (%p2028) target = $region72
        $region71: #{tpu_custom_call.1} parent=39 // pred_region
          %2032 = vsyncadd %s1990, 0
          %s2033 = sadd.s32 %s35, %s34
          %s2034 = smul.addr %s2033, 8
          %s2035 = scalar_lea.hbm %s7, %s2034
          %s2037 = sshll.u32 %s1993, 4
          %s2038 = int_to_ptr.vmem [resolvable:$true] %s2037
          %s2039 = sshll.u32 %s2035, 4
          %s2040 = int_to_ptr.hbm [resolvable:$true] %s2039
          %2042 = dma.vmem_to_hbm [thread:$0]  %s2038, 128, %s2040, %s1990
        $region72: #{tpu_custom_call.1} parent=39 // pred_fallthru
          _
      $region40: #{tpu_custom_call.1} parent=5 // pred_fallthru
        _
      %p2043 = scmp.le.s32.totalorder 2, %s25
      // Predicated region
      $region73: #{tpu_custom_call.1} parent=5 // pred_check
        %p2044 = pneg %p2043
      $region74: #{tpu_custom_call.1} parent=5 // pred_check_branch
        %2046 = sbr.rel (%p2044) target = $region76
      $region75: #{tpu_custom_call.1} parent=5 // pred_region
        %s2047 = ssub.s32 %s25, 2
        // Predicated region
        $region77: #{tpu_custom_call.1} parent=75 // pred_check
          %p2048 = pneg %p185
        $region78: #{tpu_custom_call.1} parent=75 // pred_check_branch
          %2050 = sbr.rel (%p2048) target = $region80
        $region79: #{tpu_custom_call.1} parent=75 // pred_region
          %s2051 = sand.u32 %s170, 1
          %s2052 = scalar_lea.sflag [#allocation5], %s2051
          %s2053 = sand.u32 %s170, 1
          %s2054 = smul.addr %s2053, 24
          %s2055 = scalar_lea.vmem [#allocation12], %s2054
          %2057 = dma.done %s2052, 384
        $region80: #{tpu_custom_call.1} parent=75 // pred_fallthru
          _
        // Predicated region
        $region81: #{tpu_custom_call.1} parent=75 // pred_check
          %p2058 = pneg %p213
        $region82: #{tpu_custom_call.1} parent=75 // pred_check_branch
          %2060 = sbr.rel (%p2058) target = $region84
        $region83: #{tpu_custom_call.1} parent=75 // pred_region
          %s2061 = sand.u32 %s31, 1
          %s2062 = scalar_lea.sflag [#allocation14], %s2061
          %s2063 = sand.u32 %s198, 1
          %s2064 = smul.addr %s2063, 40
          %s2065 = scalar_lea.vmem [#allocation13], %s2064
          %2067 = dma.done %s2062, 640
        $region84: #{tpu_custom_call.1} parent=75 // pred_fallthru
          _
        // Predicated region
        $region85: #{tpu_custom_call.1} parent=75 // pred_check
          %p2068 = pneg %p241
        $region86: #{tpu_custom_call.1} parent=75 // pred_check_branch
          %2070 = sbr.rel (%p2068) target = $region88
        $region87: #{tpu_custom_call.1} parent=75 // pred_region
          %s2071 = sand.u32 %s31, 1
          %s2072 = scalar_lea.sflag [#allocation14], %s2071
          %s2073 = sand.u32 %s226, 1
          %s2074 = smul.addr %s2073, 8
          %s2075 = scalar_lea.vmem [#allocation15], %s2074
          %2077 = dma.done %s2072, 128
        $region88: #{tpu_custom_call.1} parent=75 // pred_fallthru
          _
      $region76: #{tpu_custom_call.1} parent=5 // pred_fallthru
        _
    $region6: #{tpu_custom_call.1} parent=1 // loop_footer
      %s29 = sadd.s32 1, %s25
    $region7: #{tpu_custom_call.1} parent=1 // loop_footer_branch
      %24 = sbr.rel target = $region3
    $region8: #{tpu_custom_call.1} parent=1 // loop_exit
      _
    %2078 = vsyncpa [#allocation4], 1
    %s2079 = scalar_lea.sflag [#allocation4], 1
    %2080 = vsyncpa %s2079, 1
    %2081 = vsyncpa [#allocation7], 1
    %2082 = vsyncpa [#allocation10], 1
    %2083 = vsyncpa [#allocation5], 1
    %s2084 = scalar_lea.sflag [#allocation5], 1
    %2085 = vsyncpa %s2084, 1
    %2086 = vsyncpa [#allocation14], 1
    %s2087 = scalar_lea.sflag [#allocation14], 1
    %2088 = vsyncpa %s2087, 1

</llo_original>
